<compile_context>
chip_gen: v7x
topology: tpu7x:2x2x1
jax: 0.10.0
libtpu: 0.0.40
codegen_flags: <defaults>
</compile_context>

<pallas_src>
import jax
import jax.numpy as jnp
from jax.experimental import pallas as pl
from jax.experimental.pallas import tpu as pltpu

_MASK = -1e30  # folded-bias value for padded K columns -> exp() == 0


def _round_up(n, m):
    return ((n + m - 1) // m) * m


def _pick_tile(n, target):
    """Largest multiple of 128 that divides n and is <= target (n if n <= target)."""
    if n <= target or n % 128 != 0:
        return n
    t = (target // 128) * 128
    while t >= 128:
        if n % t == 0:
            return t
        t -= 128
    return n


def _make_kernel(c, tq, num_kv):
    """Returns (kernel, scratch_shapes) specialized on the number of KV tiles."""

    if num_kv == 1:
        # Single-pass softmax: no online rescale, no scratch, no pl.when.
        def kernel(wv_ref, bv_ref, gamma_ref, xq_ref, kb_ref, xk_ref, xres_ref,
                   o_ref):
            # s[j, i] = k_proj[:, j] . x[:, i] + brow_x[j]   (bias folded in)
            s = jnp.dot(kb_ref[0], xq_ref[0],
                        preferred_element_type=jnp.float32)          # (TK, TQ)
            m = jnp.max(s, axis=0, keepdims=True)                     # (1, TQ)
            p = jnp.exp(s - m)                                        # (TK, TQ)
            l = jnp.sum(p, axis=0, keepdims=True)                     # (1, TQ)
            acc = jnp.dot(xk_ref[0], p.astype(jnp.bfloat16),
                          preferred_element_type=jnp.float32)         # (C, TQ)
            inv_l = pl.reciprocal(l, approx=True)                     # EUP slot
            xat = (acc * inv_l).astype(jnp.bfloat16)                  # (C, TQ)
            out = jnp.dot(wv_ref[...], xat,
                          preferred_element_type=jnp.float32) + bv_ref[...]
            o_ref[0] = gamma_ref[0] * out + xres_ref[0]               # f32 residual

        return kernel, []

    # Multi-tile: flash-style online softmax with (C, TQ)/(1, TQ) accumulators.
    def kernel(wv_ref, bv_ref, gamma_ref, xq_ref, kb_ref, xk_ref, xres_ref,
               o_ref, m_sc, l_sc, acc_sc):
        ki = pl.program_id(2)

        s = jnp.dot(kb_ref[0], xq_ref[0],
                    preferred_element_type=jnp.float32)               # (TK, TQ)
        row_max = jnp.max(s, axis=0, keepdims=True)                   # (1, TQ)

        @pl.when(ki == 0)
        def _():
            # First KV tile: initialize stats directly, no exp(-inf)*0 rescale.
            p = jnp.exp(s - row_max)
            m_sc[...] = row_max
            l_sc[...] = jnp.sum(p, axis=0, keepdims=True)
            acc_sc[...] = jnp.dot(xk_ref[0], p.astype(jnp.bfloat16),
                                  preferred_element_type=jnp.float32)

        @pl.when(ki > 0)
        def _():
            m_prev = m_sc[...]
            m_new = jnp.maximum(m_prev, row_max)
            alpha = jnp.exp(m_prev - m_new)                           # (1, TQ)
            p = jnp.exp(s - m_new)                                    # (TK, TQ)
            l_sc[...] = alpha * l_sc[...] + jnp.sum(p, axis=0, keepdims=True)
            acc_sc[...] = alpha * acc_sc[...] + jnp.dot(
                xk_ref[0], p.astype(jnp.bfloat16),
                preferred_element_type=jnp.float32)
            m_sc[...] = m_new

        @pl.when(ki == pl.num_programs(2) - 1)
        def _():
            inv_l = pl.reciprocal(l_sc[...], approx=True)
            xat = (acc_sc[...] * inv_l).astype(jnp.bfloat16)          # (C, TQ)
            out = jnp.dot(wv_ref[...], xat,
                          preferred_element_type=jnp.float32) + bv_ref[...]
            o_ref[0] = gamma_ref[0] * out + xres_ref[0]               # f32 residual

    scratch = [
        pltpu.VMEM((1, tq), jnp.float32),   # running row max
        pltpu.VMEM((1, tq), jnp.float32),   # running denominator
        pltpu.VMEM((c, tq), jnp.float32),   # running sum_j p[j,i] * x[:,j]
    ]
    return kernel, scratch


def self_attention(x_nchw, wq, bq, wk, bk, wv, bv, gamma,
                   *, tq_target=256, tk_target=512):
    B, C, W, H = x_nchw.shape
    N = W * H
    del bk  # adds only terms constant over j -> cancels exactly in row softmax

    x_f32 = x_nchw.reshape(B, C, N).astype(jnp.float32)

    # ---- fold + hoist the Q/K projections (tiny f32 XLA matmuls, once/call) ----
    m_mat = wq.T @ wk                                        # (C, C) = Wq^T Wk
    brow = bq.T @ wk                                         # (1, C) = bq^T Wk
    kproj = jnp.einsum('cd,bdn->bcn', m_mat, x_f32)          # (B, C, N)
    browx = jnp.einsum('od,bdn->bon', brow, x_f32)           # (B, 1, N)

    # ---- pad N to a multiple of 128; mask padded K columns via the bias row ----
    n_pad = _round_up(N, 128)
    pad = n_pad - N
    if pad:
        x_f32 = jnp.pad(x_f32, ((0, 0), (0, 0), (0, pad)))
        kproj = jnp.pad(kproj, ((0, 0), (0, 0), (0, pad)))
        browx = jnp.pad(browx, ((0, 0), (0, 0), (0, pad)), constant_values=_MASK)

    # Augmented channel dim: raw channels + bias row (+ zero rows up to mult of 8).
    caug = _round_up(C + 1, 8)
    x_bf = x_f32.astype(jnp.bfloat16)                        # (B, C, Np) V operand
    q_extra = jnp.concatenate(
        [jnp.ones((B, 1, n_pad), jnp.bfloat16),
         jnp.zeros((B, caug - C - 1, n_pad), jnp.bfloat16)], axis=1)
    x_aug = jnp.concatenate([x_bf, q_extra], axis=1)         # (B, Caug, Np) Q operand
    k_extra = jnp.concatenate(
        [browx, jnp.zeros((B, caug - C - 1, n_pad), jnp.float32)], axis=1)
    kb = jnp.concatenate([kproj, k_extra], axis=1)           # (B, Caug, Np)
    kbT = jnp.transpose(kb, (0, 2, 1)).astype(jnp.bfloat16)  # (B, Np, Caug) K operand

    wv_b = wv.astype(jnp.bfloat16)                           # (C, C)
    bv_c = bv.astype(jnp.float32).reshape(C, 1)              # (C, 1)
    gamma_s = jnp.asarray(gamma, jnp.float32).reshape(1)     # SMEM scalar

    # v7x: when B == 1, make sure the qi axis has >= 2 blocks to shard over 2 TCs.
    if B == 1:
        tq_target = max(128, min(tq_target, n_pad // 2))
    tq = _pick_tile(n_pad, tq_target)
    tk = _pick_tile(n_pad, tk_target)
    num_kv = n_pad // tk
    grid = (B, n_pad // tq, num_kv)

    kernel, scratch = _make_kernel(C, tq, num_kv)

    out_flat = pl.pallas_call(
        kernel,
        out_shape=jax.ShapeDtypeStruct((B, C, n_pad), jnp.float32),
        grid_spec=pltpu.PrefetchScalarGridSpec(
            num_scalar_prefetch=0,
            grid=grid,
            in_specs=[
                pl.BlockSpec((C, C), lambda b, qi, ki: (0, 0)),            # Wv
                pl.BlockSpec((C, 1), lambda b, qi, ki: (0, 0)),            # bv
                pl.BlockSpec(memory_space=pltpu.MemorySpace.SMEM),         # gamma
                pl.BlockSpec((1, caug, tq), lambda b, qi, ki: (b, 0, qi)),  # x_aug (Q)
                pl.BlockSpec((1, tk, caug), lambda b, qi, ki: (b, ki, 0)),  # k_proj+bias (K)
                pl.BlockSpec((1, C, tk), lambda b, qi, ki: (b, 0, ki)),     # x bf16 (V)
                pl.BlockSpec((1, C, tq), lambda b, qi, ki: (b, 0, qi)),     # x f32 residual
            ],
            out_specs=pl.BlockSpec((1, C, tq), lambda b, qi, ki: (b, 0, qi)),
            scratch_shapes=scratch,
        ),
        compiler_params=pltpu.CompilerParams(
            dimension_semantics=("parallel", "parallel", "arbitrary")),
    )(wv_b, bv_c, gamma_s, x_aug, kbT, x_bf, x_f32)

    return out_flat[:, :, :N].reshape(B, C, W, H)


def self_attention_ref(x_nchw, wq, bq, wk, bk, wv, bv, gamma):
    """Pure-JAX f32 reference mirroring the PyTorch forward exactly."""
    B, C, W, H = x_nchw.shape
    N = W * H
    x = x_nchw.reshape(B, C, N).astype(jnp.float32)
    q = jnp.einsum('oc,bcn->bon', wq, x) + bq[None]      # (B, Cq, N)
    k = jnp.einsum('oc,bcn->bon', wk, x) + bk[None]
    v = jnp.einsum('oc,bcn->bon', wv, x) + bv[None]
    energy = jnp.einsum('bci,bcj->bij', q, k)            # (B, N, N)
    attn = jax.nn.softmax(energy, axis=-1)
    out = jnp.einsum('bcj,bij->bci', v, attn)            # (B, C, N)
    return (gamma[0] * out + x).reshape(B, C, W, H)


if __name__ == "__main__":
    B, C, W, H = 2, 32, 16, 16        # in_dim = 32 -> query/key dim = 4, N = 256
    Cq = C // 8

    key = jax.random.PRNGKey(0)
    k0, k1, k2, k3, k4, k5, k6 = jax.random.split(key, 7)

    x = jax.random.normal(k0, (B, C, W, H), dtype=jnp.float32)
    # Conv2d 1x1 -> weight (C_out, C_in), bias (C_out, 1).
    wq = jax.random.normal(k1, (Cq, C), dtype=jnp.float32) * 0.1
    bq = jax.random.normal(k2, (Cq, 1), dtype=jnp.float32) * 0.1
    wk = jax.random.normal(k3, (Cq, C), dtype=jnp.float32) * 0.1
    bk = jax.random.normal(k4, (Cq, 1), dtype=jnp.float32) * 0.1
    wv = jax.random.normal(k5, (C, C), dtype=jnp.float32) * 0.1
    bv = jax.random.normal(k6, (C, 1), dtype=jnp.float32) * 0.1

    gamma = jnp.array([0.5], dtype=jnp.float32)   # nonzero: exercise attention path
    ref = self_attention_ref(x, wq, bq, wk, bk, wv, bv, gamma)

    # 1) single-KV-tile path (N = 256 fits one K tile -> single-pass softmax).
    out1 = self_attention(x, wq, bq, wk, bk, wv, bv, gamma)
    jax.block_until_ready(out1)
    assert out1.shape == (B, C, W, H)
    err1 = float(jnp.max(jnp.abs(out1 - ref)))
    assert jnp.allclose(out1, ref, atol=4e-2, rtol=4e-2), \
        f"single-tile mismatch vs reference: max abs err = {err1}"

    # 2) multi-KV-tile path (tk = 128 -> 2 K tiles, online softmax + ki>0 guard).
    out2 = self_attention(x, wq, bq, wk, bk, wv, bv, gamma,
                          tq_target=128, tk_target=128)
    jax.block_until_ready(out2)
    err2 = float(jnp.max(jnp.abs(out2 - ref)))
    assert jnp.allclose(out2, ref, atol=4e-2, rtol=4e-2), \
        f"multi-tile mismatch vs reference: max abs err = {err2}"

    # 3) gamma == 0 (PyTorch init): identity path must be exact (f32 residual).
    gamma0 = jnp.zeros((1,), dtype=jnp.float32)
    out3 = self_attention(x, wq, bq, wk, bk, wv, bv, gamma0)
    jax.block_until_ready(out3)
    assert jnp.array_equal(out3, x), "gamma=0 identity path is not exact"

    print("KERNEL_OK")
</pallas_src>

<mosaic_0001>
module attributes {stable_mosaic.version = 11 : i64} {
  func.func @kernel(%arg0: i32, %arg1: i32, %arg2: i32, %arg3: memref<32x32xbf16, #tpu.memory_space<vmem>>, %arg4: memref<32x1xf32, #tpu.memory_space<vmem>>, %arg5: memref<1xf32, #tpu.memory_space<smem>>, %arg6: memref<1x40x256xbf16, #tpu.memory_space<vmem>>, %arg7: memref<1x256x40xbf16, #tpu.memory_space<vmem>>, %arg8: memref<1x32x256xbf16, #tpu.memory_space<vmem>>, %arg9: memref<1x32x256xf32, #tpu.memory_space<vmem>>, %arg10: memref<1x32x256xf32, #tpu.memory_space<vmem>>) attributes {dimension_semantics = [#tpu.dimension_semantics<parallel>, #tpu.dimension_semantics<parallel>, #tpu.dimension_semantics<arbitrary>], iteration_bounds = array<i64: 2, 1, 1>, scalar_prefetch = 0 : i64, scratch_operands = 0 : i64, tpu.core_type = #tpu.core_type<tc>, window_params = [{pipeline_mode = #tpu.pipeline_mode<synchronous>, transform_indices = @transform_0, window_bounds = array<i64: 32, 32>}, {pipeline_mode = #tpu.pipeline_mode<synchronous>, transform_indices = @transform_1, window_bounds = array<i64: 32, 1>}, {transform_indices = @transform_2, window_bounds = array<i64: 1>}, {transform_indices = @transform_3, window_bounds = array<i64: 1, 40, 256>}, {transform_indices = @transform_4, window_bounds = array<i64: 1, 256, 40>}, {transform_indices = @transform_5, window_bounds = array<i64: 1, 32, 256>}, {transform_indices = @transform_6, window_bounds = array<i64: 1, 32, 256>}, {transform_indices = @transform_7, window_bounds = array<i64: 1, 32, 256>}]} {
    %c0 = arith.constant 0 : index
    %c0_0 = arith.constant 0 : index
    %c0_1 = arith.constant 0 : index
    %0 = vector.load %arg7[%c0, %c0_0, %c0_1] : memref<1x256x40xbf16, #tpu.memory_space<vmem>>, vector<1x256x40xbf16>
    %1 = vector.shape_cast %0 : vector<1x256x40xbf16> to vector<256x40xbf16>
    %c0_2 = arith.constant 0 : index
    %c0_3 = arith.constant 0 : index
    %c0_4 = arith.constant 0 : index
    %2 = vector.load %arg6[%c0_2, %c0_3, %c0_4] : memref<1x40x256xbf16, #tpu.memory_space<vmem>>, vector<1x40x256xbf16>
    %3 = vector.shape_cast %2 : vector<1x40x256xbf16> to vector<40x256xbf16>
    %cst = arith.constant dense<0.000000e+00> : vector<256x256xf32>
    %4 = tpu.matmul %1, %3, %cst {dimension_numbers = #tpu.dot_dimension_numbers<[1], [0], [0], [1], [0, 0, 1, 1], [], []>} : vector<256x40xbf16>, vector<40x256xbf16>, vector<256x256xf32> -> vector<256x256xf32>
    %cst_5 = arith.constant dense<0xFF800000> : vector<256xf32>
    %5 = vector.multi_reduction <maximumf>, %4, %cst_5 [0] : vector<256x256xf32> to vector<256xf32>
    %6 = vector.shape_cast %5 : vector<256xf32> to vector<1x256xf32>
    %7 = vector.broadcast %6 : vector<1x256xf32> to vector<256x256xf32>
    %8 = arith.subf %4, %7 : vector<256x256xf32>
    %9 = math.exp %8 : vector<256x256xf32>
    %cst_6 = arith.constant dense<0.000000e+00> : vector<256xf32>
    %10 = vector.multi_reduction <add>, %9, %cst_6 [0] : vector<256x256xf32> to vector<256xf32>
    %11 = vector.shape_cast %10 : vector<256xf32> to vector<1x256xf32>
    %c0_7 = arith.constant 0 : index
    %c0_8 = arith.constant 0 : index
    %c0_9 = arith.constant 0 : index
    %12 = vector.load %arg8[%c0_7, %c0_8, %c0_9] : memref<1x32x256xbf16, #tpu.memory_space<vmem>>, vector<1x32x256xbf16>
    %13 = vector.shape_cast %12 : vector<1x32x256xbf16> to vector<32x256xbf16>
    %14 = arith.truncf %9 : vector<256x256xf32> to vector<256x256xbf16>
    %cst_10 = arith.constant dense<0.000000e+00> : vector<32x256xf32>
    %15 = tpu.matmul %13, %14, %cst_10 {dimension_numbers = #tpu.dot_dimension_numbers<[1], [0], [0], [1], [0, 0, 1, 1], [], []>} : vector<32x256xbf16>, vector<256x256xbf16>, vector<32x256xf32> -> vector<32x256xf32>
    %16 = tpu.reciprocal %11 {approx = true} : vector<1x256xf32> -> vector<1x256xf32>
    %17 = vector.broadcast %16 : vector<1x256xf32> to vector<32x256xf32>
    %18 = arith.mulf %15, %17 : vector<32x256xf32>
    %19 = arith.truncf %18 : vector<32x256xf32> to vector<32x256xbf16>
    %c0_11 = arith.constant 0 : index
    %c0_12 = arith.constant 0 : index
    %20 = vector.load %arg3[%c0_11, %c0_12] : memref<32x32xbf16, #tpu.memory_space<vmem>>, vector<32x32xbf16>
    %cst_13 = arith.constant dense<0.000000e+00> : vector<32x256xf32>
    %21 = tpu.matmul %20, %19, %cst_13 {dimension_numbers = #tpu.dot_dimension_numbers<[1], [0], [0], [1], [0, 0, 1, 1], [], []>} : vector<32x32xbf16>, vector<32x256xbf16>, vector<32x256xf32> -> vector<32x256xf32>
    %c0_14 = arith.constant 0 : index
    %c0_15 = arith.constant 0 : index
    %22 = vector.load %arg4[%c0_14, %c0_15] : memref<32x1xf32, #tpu.memory_space<vmem>>, vector<32x1xf32>
    %23 = vector.broadcast %22 : vector<32x1xf32> to vector<32x256xf32>
    %24 = arith.addf %21, %23 : vector<32x256xf32>
    %c0_16 = arith.constant 0 : index
    %25 = memref.load %arg5[%c0_16] : memref<1xf32, #tpu.memory_space<smem>>
    %26 = vector.broadcast %25 : f32 to vector<32x256xf32>
    %27 = arith.mulf %26, %24 : vector<32x256xf32>
    %c0_17 = arith.constant 0 : index
    %c0_18 = arith.constant 0 : index
    %c0_19 = arith.constant 0 : index
    %28 = vector.load %arg9[%c0_17, %c0_18, %c0_19] : memref<1x32x256xf32, #tpu.memory_space<vmem>>, vector<1x32x256xf32>
    %29 = vector.shape_cast %28 : vector<1x32x256xf32> to vector<32x256xf32>
    %30 = arith.addf %27, %29 : vector<32x256xf32>
    %c0_20 = arith.constant 0 : index
    %c0_21 = arith.constant 0 : index
    %c0_22 = arith.constant 0 : index
    %31 = vector.load %arg10[%c0_20, %c0_21, %c0_22] : memref<1x32x256xf32, #tpu.memory_space<vmem>>, vector<1x32x256xf32>
    %32 = vector.shape_cast %31 : vector<1x32x256xf32> to vector<32x256xf32>
    %33 = vector.shape_cast %30 : vector<32x256xf32> to vector<1x32x256xf32>
    tpu.vector_store %arg10[%c0_20, %c0_21, %c0_22], %33 {strides = array<i32>} : memref<1x32x256xf32, #tpu.memory_space<vmem>>, vector<1x32x256xf32>,
    return
  }
  func.func @transform_0(%arg0: i32, %arg1: i32, %arg2: i32) -> (i32, i32) {
    %c0_i32 = arith.constant 0 : i32
    %c0_i32_0 = arith.constant 0 : i32
    %c0_i32_1 = arith.constant 0 : i32
    return %c0_i32, %c0_i32_0 : i32, i32
  }
  func.func @transform_1(%arg0: i32, %arg1: i32, %arg2: i32) -> (i32, i32) {
    %c0_i32 = arith.constant 0 : i32
    %c0_i32_0 = arith.constant 0 : i32
    %c0_i32_1 = arith.constant 0 : i32
    return %c0_i32, %c0_i32_0 : i32, i32
  }
  func.func @transform_2(%arg0: i32, %arg1: i32, %arg2: i32) -> i32 {
    %c0_i32 = arith.constant 0 : i32
    %c0_i32_0 = arith.constant 0 : i32
    return %c0_i32 : i32
  }
  func.func @transform_3(%arg0: i32, %arg1: i32, %arg2: i32) -> (i32, i32, i32) {
    %c0_i32 = arith.constant 0 : i32
    %c0_i32_0 = arith.constant 0 : i32
    return %arg0, %c0_i32, %arg1 : i32, i32, i32
  }
  func.func @transform_4(%arg0: i32, %arg1: i32, %arg2: i32) -> (i32, i32, i32) {
    %c0_i32 = arith.constant 0 : i32
    %c0_i32_0 = arith.constant 0 : i32
    return %arg0, %arg2, %c0_i32 : i32, i32, i32
  }
  func.func @transform_5(%arg0: i32, %arg1: i32, %arg2: i32) -> (i32, i32, i32) {
    %c0_i32 = arith.constant 0 : i32
    %c0_i32_0 = arith.constant 0 : i32
    return %arg0, %c0_i32, %arg2 : i32, i32, i32
  }
  func.func @transform_6(%arg0: i32, %arg1: i32, %arg2: i32) -> (i32, i32, i32) {
    %c0_i32 = arith.constant 0 : i32
    %c0_i32_0 = arith.constant 0 : i32
    return %arg0, %c0_i32, %arg1 : i32, i32, i32
  }
  func.func @transform_7(%arg0: i32, %arg1: i32, %arg2: i32) -> (i32, i32, i32) {
    %c0_i32 = arith.constant 0 : i32
    %c0_i32_0 = arith.constant 0 : i32
    return %arg0, %c0_i32, %arg1 : i32, i32, i32
  }
}

</mosaic_0001>

<llo_original>
// kernel: tpu_custom_call.1
$region0: #{tpu_custom_call.1}
  #allocation0 [shape = 'u32[]', space=smem, size = 0x4, offset = 0x4, fixed_abs, tag = 'smem constant byte address 0x4 - core index']
  #allocation1 [shape = 'u32[144,128]{1,0:T(1,128)}', space=vmem, size = 0x12000, scoped, tag = 'internal scratch']
  #allocation2 [shape = 'f32[1]{0:T(128)S(6)}', space=smem, size = 0x200, scoped, tag = 'scoped memory for tpu_custom_call.1']
  %s0 = inlined_call_operand.vmem [shape: bf16[32,32], index: 0, kind: input, shape index: {}]
  %s1 = inlined_call_operand.vmem [shape: f32[32,1], index: 1, kind: input, shape index: {}]
  %s2 = inlined_call_operand.<no memory space> [shape: f32[1], index: 2, kind: input, shape index: {}]
  %s3 = inlined_call_operand.vmem [shape: bf16[2,40,256], index: 3, kind: input, shape index: {}]
  %s4 = inlined_call_operand.vmem [shape: bf16[2,256,40], index: 4, kind: input, shape index: {}]
  %s5 = inlined_call_operand.vmem [shape: bf16[2,32,256], index: 5, kind: input, shape index: {}]
  %s6 = inlined_call_operand.vmem [shape: f32[2,32,256], index: 6, kind: input, shape index: {}]
  %s7 = inlined_call_operand.hbm [shape: f32[2,32,256], index: 7, kind: output, shape index: {}]
  %s8 = sld [smem:[#allocation0]]
  $region61: #{tpu_custom_call.1} parent=0
    _
  %s10 = ssub.s32 1, %s8
  %s11 = scalar_select 0, %s10, %s8
  %12 = sst [smem:[#allocation2]] %s2
  $region1: #{tpu_custom_call.1} parent=0
    #allocation3 [shape = 'u8[65536]{0}', space=vmem, size = 0x10000, scoped, tag = 'output window, operand 0']
    #allocation4 [shape = 's32[2]{0}', space=sflag, size = 0x8, scoped, tag = 'scoped memory for tpu_custom_call.1']
    %13 = vsyncpa [#allocation4], 0
    %s14 = scalar_lea.sflag [#allocation4], 1
    %15 = vsyncpa %s14, 0
    loop: start=0, step=1, limit=4
    $region2: #{tpu_custom_call.1} parent=1 // loop_pre_header
      _
    $region3: #{tpu_custom_call.1} parent=1 // loop_header
      %s17 = sphi 0, %s21
      %p18 = scmp.ge.s32.totalorder %s17, 4
      %s24 = sphi 0, %s43
      %s25 = sphi 0, %s39
      %s26 = sphi 0, %s35
      %s27 = sphi 0, %s24
      %s28 = sphi 0, %s25
      %s29 = sphi 0, %s26
      %s30 = sphi 0, %s27
      %s31 = sphi 0, %s28
      %s32 = sphi 0, %s29
      %s44 = sphi 0, %s44
      %s46 = sphi 0, %s44
      %s47 = sphi 0, %s46
      %s61 = sphi 0, %s47
      %s65 = sphi 0, %s65
      %s67 = sphi 0, %s65
      %s68 = sphi 0, %s67
      %s82 = sphi 0, %s68
      %s86 = sphi 0, %s86
      %s88 = sphi 0, %s86
      %s89 = sphi 0, %s88
      %s103 = sphi 0, %s89
      %s111 = sphi 0, %s113
      %s114 = sphi 0, %s111
      %s115 = sphi 0, %s114
      %s131 = sphi 0, %s115
      %s139 = sphi 0, %s141
      %s142 = sphi 0, %s139
      %s143 = sphi 0, %s142
      %s159 = sphi 0, %s143
      %s167 = sphi 0, %s169
      %s170 = sphi 0, %s167
      %s171 = sphi 0, %s170
      %s187 = sphi 0, %s171
      %s195 = sphi 0, %s197
      %s198 = sphi 0, %s195
      %s199 = sphi 0, %s198
      %s215 = sphi 0, %s199
      %s223 = sphi 0, %s225
      %s226 = sphi 0, %s223
      %s227 = sphi 0, %s226
      %s243 = sphi 0, %s227
    $region4: #{tpu_custom_call.1} parent=1 // loop_header_branch
      %20 = sbr.rel (%p18) target = $region8
    $region5: #{tpu_custom_call.1} parent=1 // loop_body
      %s22 = ssub.s32 %s17, 1
      %s23 = ssub.s32 %s17, 2
      %s33 = sadd.s32 1, %s26
      %p34 = scmp.ge.s32.totalorder %s33, 1
      %s35 = scalar_select %p34, 0, %s33
      %s36 = sadd.s32 1, %s25
      %s37 = scalar_select %p34, %s36, %s25
      %p38 = scmp.ge.s32.totalorder %s37, 1
      %s39 = scalar_select %p38, 0, %s37
      %s40 = sadd.s32 1, %s24
      %s41 = scalar_select %p38, %s40, %s24
      %p42 = scmp.ge.s32.totalorder %s41, 2
      %s43 = scalar_select %p42, 0, %s41
      %s45 = sadd.s32 %s44, 1
      %p48 = scmp.eq.s32.totalorder %s17, 1
      %p49 = scmp.ne.s32.totalorder %s44, %s46
      %p50 = scmp.eq.s32.totalorder %s17, 0
      %p51 = por %p49, %p50
      %p52 = scmp.ne.s32.totalorder %s44, %s46
      %p53 = scmp.eq.s32.totalorder %s22, 1
      %p54 = por %p52, %p53
      %p55 = scmp.ne.s32.totalorder %s46, %s47
      %p56 = scmp.eq.s32.totalorder %s22, 0
      %p57 = por %p55, %p56
      %p58 = scmp.ne.s32.totalorder %s46, %s47
      %p59 = scmp.eq.s32.totalorder %s23, 1
      %p60 = por %p58, %p59
      %p62 = scmp.ne.s32.totalorder %s47, %s61
      %p63 = scmp.eq.s32.totalorder %s23, 0
      %p64 = por %p62, %p63
      %s66 = sadd.s32 %s65, 1
      %p69 = scmp.eq.s32.totalorder %s17, 1
      %p70 = scmp.ne.s32.totalorder %s65, %s67
      %p71 = scmp.eq.s32.totalorder %s17, 0
      %p72 = por %p70, %p71
      %p73 = scmp.ne.s32.totalorder %s65, %s67
      %p74 = scmp.eq.s32.totalorder %s22, 1
      %p75 = por %p73, %p74
      %p76 = scmp.ne.s32.totalorder %s67, %s68
      %p77 = scmp.eq.s32.totalorder %s22, 0
      %p78 = por %p76, %p77
      %p79 = scmp.ne.s32.totalorder %s67, %s68
      %p80 = scmp.eq.s32.totalorder %s23, 1
      %p81 = por %p79, %p80
      %p83 = scmp.ne.s32.totalorder %s68, %s82
      %p84 = scmp.eq.s32.totalorder %s23, 0
      %p85 = por %p83, %p84
      %s87 = sadd.s32 %s86, 1
      %p90 = scmp.eq.s32.totalorder %s17, 1
      %p91 = scmp.ne.s32.totalorder %s86, %s88
      %p92 = scmp.eq.s32.totalorder %s17, 0
      %p93 = por %p91, %p92
      %p94 = scmp.ne.s32.totalorder %s86, %s88
      %p95 = scmp.eq.s32.totalorder %s22, 1
      %p96 = por %p94, %p95
      %p97 = scmp.ne.s32.totalorder %s88, %s89
      %p98 = scmp.eq.s32.totalorder %s22, 0
      %p99 = por %p97, %p98
      %p100 = scmp.ne.s32.totalorder %s88, %s89
      %p101 = scmp.eq.s32.totalorder %s23, 1
      %p102 = por %p100, %p101
      %p104 = scmp.ne.s32.totalorder %s89, %s103
      %p105 = scmp.eq.s32.totalorder %s23, 0
      %p106 = por %p104, %p105
      %s107 = ssub.s32 %s24, %s43
      %s108 = ssub.s32 %s25, %s39
      %s109 = sor.u32 %s107, %s108
      %p110 = scmp.eq.s32.totalorder %s109, 0
      %s112 = sadd.s32 %s111, 1
      %s113 = scalar_select %p110, %s111, %s112
      %p116 = pneg %p110
      %p117 = scmp.eq.s32.totalorder %s17, 1
      %p118 = por %p116, %p117
      %p119 = scmp.ne.s32.totalorder %s111, %s114
      %p120 = scmp.eq.s32.totalorder %s17, 0
      %p121 = por %p119, %p120
      %p122 = scmp.ne.s32.totalorder %s111, %s114
      %p123 = scmp.eq.s32.totalorder %s22, 1
      %p124 = por %p122, %p123
      %p125 = scmp.ne.s32.totalorder %s114, %s115
      %p126 = scmp.eq.s32.totalorder %s22, 0
      %p127 = por %p125, %p126
      %p128 = scmp.ne.s32.totalorder %s114, %s115
      %p129 = scmp.eq.s32.totalorder %s23, 1
      %p130 = por %p128, %p129
      %p132 = scmp.ne.s32.totalorder %s115, %s131
      %p133 = scmp.eq.s32.totalorder %s23, 0
      %p134 = por %p132, %p133
      %s135 = ssub.s32 %s24, %s43
      %s136 = ssub.s32 %s26, %s35
      %s137 = sor.u32 %s135, %s136
      %p138 = scmp.eq.s32.totalorder %s137, 0
      %s140 = sadd.s32 %s139, 1
      %s141 = scalar_select %p138, %s139, %s140
      %p144 = pneg %p138
      %p145 = scmp.eq.s32.totalorder %s17, 1
      %p146 = por %p144, %p145
      %p147 = scmp.ne.s32.totalorder %s139, %s142
      %p148 = scmp.eq.s32.totalorder %s17, 0
      %p149 = por %p147, %p148
      %p150 = scmp.ne.s32.totalorder %s139, %s142
      %p151 = scmp.eq.s32.totalorder %s22, 1
      %p152 = por %p150, %p151
      %p153 = scmp.ne.s32.totalorder %s142, %s143
      %p154 = scmp.eq.s32.totalorder %s22, 0
      %p155 = por %p153, %p154
      %p156 = scmp.ne.s32.totalorder %s142, %s143
      %p157 = scmp.eq.s32.totalorder %s23, 1
      %p158 = por %p156, %p157
      %p160 = scmp.ne.s32.totalorder %s143, %s159
      %p161 = scmp.eq.s32.totalorder %s23, 0
      %p162 = por %p160, %p161
      %s163 = ssub.s32 %s24, %s43
      %s164 = ssub.s32 %s26, %s35
      %s165 = sor.u32 %s163, %s164
      %p166 = scmp.eq.s32.totalorder %s165, 0
      %s168 = sadd.s32 %s167, 1
      %s169 = scalar_select %p166, %s167, %s168
      %p172 = pneg %p166
      %p173 = scmp.eq.s32.totalorder %s17, 1
      %p174 = por %p172, %p173
      %p175 = scmp.ne.s32.totalorder %s167, %s170
      %p176 = scmp.eq.s32.totalorder %s17, 0
      %p177 = por %p175, %p176
      %p178 = scmp.ne.s32.totalorder %s167, %s170
      %p179 = scmp.eq.s32.totalorder %s22, 1
      %p180 = por %p178, %p179
      %p181 = scmp.ne.s32.totalorder %s170, %s171
      %p182 = scmp.eq.s32.totalorder %s22, 0
      %p183 = por %p181, %p182
      %p184 = scmp.ne.s32.totalorder %s170, %s171
      %p185 = scmp.eq.s32.totalorder %s23, 1
      %p186 = por %p184, %p185
      %p188 = scmp.ne.s32.totalorder %s171, %s187
      %p189 = scmp.eq.s32.totalorder %s23, 0
      %p190 = por %p188, %p189
      %s191 = ssub.s32 %s24, %s43
      %s192 = ssub.s32 %s25, %s39
      %s193 = sor.u32 %s191, %s192
      %p194 = scmp.eq.s32.totalorder %s193, 0
      %s196 = sadd.s32 %s195, 1
      %s197 = scalar_select %p194, %s195, %s196
      %p200 = pneg %p194
      %p201 = scmp.eq.s32.totalorder %s17, 1
      %p202 = por %p200, %p201
      %p203 = scmp.ne.s32.totalorder %s195, %s198
      %p204 = scmp.eq.s32.totalorder %s17, 0
      %p205 = por %p203, %p204
      %p206 = scmp.ne.s32.totalorder %s195, %s198
      %p207 = scmp.eq.s32.totalorder %s22, 1
      %p208 = por %p206, %p207
      %p209 = scmp.ne.s32.totalorder %s198, %s199
      %p210 = scmp.eq.s32.totalorder %s22, 0
      %p211 = por %p209, %p210
      %p212 = scmp.ne.s32.totalorder %s198, %s199
      %p213 = scmp.eq.s32.totalorder %s23, 1
      %p214 = por %p212, %p213
      %p216 = scmp.ne.s32.totalorder %s199, %s215
      %p217 = scmp.eq.s32.totalorder %s23, 0
      %p218 = por %p216, %p217
      %s219 = ssub.s32 %s24, %s43
      %s220 = ssub.s32 %s25, %s39
      %s221 = sor.u32 %s219, %s220
      %p222 = scmp.eq.s32.totalorder %s221, 0
      %s224 = sadd.s32 %s223, 1
      %s225 = scalar_select %p222, %s223, %s224
      %p228 = pneg %p222
      %p229 = scmp.eq.s32.totalorder %s17, 1
      %p230 = por %p228, %p229
      %p231 = scmp.ne.s32.totalorder %s223, %s226
      %p232 = scmp.eq.s32.totalorder %s17, 0
      %p233 = por %p231, %p232
      %p234 = scmp.ne.s32.totalorder %s223, %s226
      %p235 = scmp.eq.s32.totalorder %s22, 1
      %p236 = por %p234, %p235
      %p237 = scmp.ne.s32.totalorder %s226, %s227
      %p238 = scmp.eq.s32.totalorder %s22, 0
      %p239 = por %p237, %p238
      %p240 = scmp.ne.s32.totalorder %s226, %s227
      %p241 = scmp.eq.s32.totalorder %s23, 1
      %p242 = por %p240, %p241
      %p244 = scmp.ne.s32.totalorder %s227, %s243
      %p245 = scmp.eq.s32.totalorder %s23, 0
      %p246 = por %p244, %p245
      %p247 = scmp.le.s32.totalorder 1, %s17
      %p248 = scmp.lt.s32.totalorder %s17, 3
      %p249 = pnand %p247, %p248
      %p250 = pneg %p249
      // Predicated region
      $region9: #{tpu_custom_call.1} parent=5 // pred_check
        _
      $region10: #{tpu_custom_call.1} parent=5 // pred_check_branch
        %252 = sbr.rel (%p249) target = $region12
      $region11: #{tpu_custom_call.1} parent=5 // pred_region
        %s253 = ssub.s32 %s17, 1
        // Predicated region
        $region13: #{tpu_custom_call.1} parent=11 // pred_check
          %p254 = pneg %p57
        $region14: #{tpu_custom_call.1} parent=11 // pred_check_branch
          %256 = sbr.rel (%p254) target = $region16
        $region15: #{tpu_custom_call.1} parent=11 // pred_region
          _
        $region16: #{tpu_custom_call.1} parent=11 // pred_fallthru
          _
        // Predicated region
        $region17: #{tpu_custom_call.1} parent=11 // pred_check
          %p257 = pneg %p78
        $region18: #{tpu_custom_call.1} parent=11 // pred_check_branch
          %259 = sbr.rel (%p257) target = $region20
        $region19: #{tpu_custom_call.1} parent=11 // pred_region
          _
        $region20: #{tpu_custom_call.1} parent=11 // pred_fallthru
          _
        // Predicated region
        $region21: #{tpu_custom_call.1} parent=11 // pred_check
          %p260 = pneg %p99
        $region22: #{tpu_custom_call.1} parent=11 // pred_check_branch
          %262 = sbr.rel (%p260) target = $region24
        $region23: #{tpu_custom_call.1} parent=11 // pred_region
          _
        $region24: #{tpu_custom_call.1} parent=11 // pred_fallthru
          _
      $region12: #{tpu_custom_call.1} parent=5 // pred_fallthru
        _
      %p263 = scmp.lt.s32.totalorder %s17, 2
      // Predicated region
      $region25: #{tpu_custom_call.1} parent=5 // pred_check
        %p264 = pneg %p263
      $region26: #{tpu_custom_call.1} parent=5 // pred_check_branch
        %266 = sbr.rel (%p264) target = $region28
      $region27: #{tpu_custom_call.1} parent=5 // pred_region
        // Predicated region
        $region29: #{tpu_custom_call.1} parent=27 // pred_check
          %p267 = pneg %p121
        $region30: #{tpu_custom_call.1} parent=27 // pred_check_branch
          %269 = sbr.rel (%p267) target = $region32
        $region31: #{tpu_custom_call.1} parent=27 // pred_region
          %s270 = smul.u32 2, %s25
          %p271 = scmp.lt.s32.totalorder %s24, 1
          %s272 = scalar_select %p271, %s24, 1
          %p273 = scmp.lt.s32.totalorder %s270, 1
          %s274 = scalar_select %p273, %s270, 1
          %s275 = smul.addr %s272, 10
          %s276 = sadd.s32 %s274, %s275
          %s277 = smul.addr %s276, 4
          %s278 = scalar_lea.vmem %s3, %s277
          %s279 = smul.u32 2, %s25
        $region32: #{tpu_custom_call.1} parent=27 // pred_fallthru
          _
        // Predicated region
        $region33: #{tpu_custom_call.1} parent=27 // pred_check
          %p280 = pneg %p149
        $region34: #{tpu_custom_call.1} parent=27 // pred_check_branch
          %282 = sbr.rel (%p280) target = $region36
        $region35: #{tpu_custom_call.1} parent=27 // pred_region
          %s283 = smul.u32 32, %s26
          %p284 = scmp.lt.s32.totalorder %s24, 1
          %s285 = scalar_select %p284, %s24, 1
          %p286 = scmp.lt.s32.totalorder %s283, 31
          %s287 = scalar_select %p286, %s283, 31
          %s288 = smul.addr %s285, 32
          %s289 = sadd.s32 %s287, %s288
          %s290 = smul.addr %s289, 4
          %s291 = scalar_lea.vmem %s4, %s290
          %s292 = smul.u32 32, %s26
        $region36: #{tpu_custom_call.1} parent=27 // pred_fallthru
          _
        // Predicated region
        $region37: #{tpu_custom_call.1} parent=27 // pred_check
          %p293 = pneg %p177
        $region38: #{tpu_custom_call.1} parent=27 // pred_check_branch
          %295 = sbr.rel (%p293) target = $region40
        $region39: #{tpu_custom_call.1} parent=27 // pred_region
          %s296 = smul.u32 2, %s26
          %p297 = scmp.lt.s32.totalorder %s24, 1
          %s298 = scalar_select %p297, %s24, 1
          %p299 = scmp.lt.s32.totalorder %s296, 1
          %s300 = scalar_select %p299, %s296, 1
          %s301 = smul.addr %s298, 8
          %s302 = sadd.s32 %s300, %s301
          %s303 = smul.addr %s302, 4
          %s304 = scalar_lea.vmem %s5, %s303
          %s305 = smul.u32 2, %s26
        $region40: #{tpu_custom_call.1} parent=27 // pred_fallthru
          _
        // Predicated region
        $region41: #{tpu_custom_call.1} parent=27 // pred_check
          %p306 = pneg %p205
        $region42: #{tpu_custom_call.1} parent=27 // pred_check_branch
          %308 = sbr.rel (%p306) target = $region44
        $region43: #{tpu_custom_call.1} parent=27 // pred_region
          %s309 = smul.u32 2, %s25
          %p310 = scmp.lt.s32.totalorder %s24, 1
          %s311 = scalar_select %p310, %s24, 1
          %p312 = scmp.lt.s32.totalorder %s309, 1
          %s313 = scalar_select %p312, %s309, 1
          %s314 = smul.addr %s311, 8
          %s315 = sadd.s32 %s313, %s314
          %s316 = smul.addr %s315, 8
          %s317 = scalar_lea.vmem %s6, %s316
          %s318 = smul.u32 2, %s25
        $region44: #{tpu_custom_call.1} parent=27 // pred_fallthru
          _
      $region28: #{tpu_custom_call.1} parent=5 // pred_fallthru
        _
      %p319 = scmp.le.s32.totalorder 1, %s17
      %p320 = scmp.lt.s32.totalorder %s17, 3
      %p321 = pnand %p319, %p320
      %p322 = pneg %p321
      // Predicated region
      $region45: #{tpu_custom_call.1} parent=5 // pred_check
        _
      $region46: #{tpu_custom_call.1} parent=5 // pred_check_branch
        %324 = sbr.rel (%p321) target = $region48
      $region47: #{tpu_custom_call.1} parent=5 // pred_region
        %s325 = ssub.s32 %s17, 1
        %p326 = pneg %p57
        %p327 = pneg %p54
        %p328 = pneg %p78
        %p329 = pneg %p75
        %p330 = pneg %p99
        %p331 = pneg %p96
        %s332 = smul.u32 2, %s28
        %p333 = scmp.lt.s32.totalorder %s27, 1
        %s334 = scalar_select %p333, %s27, 1
        %p335 = scmp.lt.s32.totalorder %s332, 1
        %s336 = scalar_select %p335, %s332, 1
        %s337 = smul.addr %s334, 10
        %s338 = sadd.s32 %s336, %s337
        %s339 = smul.addr %s338, 4
        %s340 = scalar_lea.vmem %s3, %s339
        %p341 = pneg %p127
        %p342 = pneg %p124
        %s343 = smul.u32 32, %s29
        %p344 = scmp.lt.s32.totalorder %s27, 1
        %s345 = scalar_select %p344, %s27, 1
        %p346 = scmp.lt.s32.totalorder %s343, 31
        %s347 = scalar_select %p346, %s343, 31
        %s348 = smul.addr %s345, 32
        %s349 = sadd.s32 %s347, %s348
        %s350 = smul.addr %s349, 4
        %s351 = scalar_lea.vmem %s4, %s350
        %p352 = pneg %p155
        %p353 = pneg %p152
        %s354 = smul.u32 2, %s29
        %p355 = scmp.lt.s32.totalorder %s27, 1
        %s356 = scalar_select %p355, %s27, 1
        %p357 = scmp.lt.s32.totalorder %s354, 1
        %s358 = scalar_select %p357, %s354, 1
        %s359 = smul.addr %s356, 8
        %s360 = sadd.s32 %s358, %s359
        %s361 = smul.addr %s360, 4
        %s362 = scalar_lea.vmem %s5, %s361
        %p363 = pneg %p183
        %p364 = pneg %p180
        %s365 = smul.u32 2, %s28
        %p366 = scmp.lt.s32.totalorder %s27, 1
        %s367 = scalar_select %p366, %s27, 1
        %p368 = scmp.lt.s32.totalorder %s365, 1
        %s369 = scalar_select %p368, %s365, 1
        %s370 = smul.addr %s367, 8
        %s371 = sadd.s32 %s369, %s370
        %s372 = smul.addr %s371, 8
        %s373 = scalar_lea.vmem %s6, %s372
        %p374 = pneg %p211
        %p375 = pneg %p208
        %p376 = pneg %p239
        %p377 = pneg %p236
        %s378 = sand.u32 %s226, 1
        %s379 = scalar_lea.sflag [#allocation4], %s378
        %s380 = sand.u32 %s226, 1
        %s381 = smul.addr %s380, 64
        %s382 = scalar_lea.vmem [#allocation3], %s381
        %s383 = smul.u32 2, %s28
        %p384 = scmp.lt.s32.totalorder %s27, 1
        %s385 = scalar_select %p384, %s27, 1
        %p386 = scmp.lt.s32.totalorder %s383, 1
        %s387 = scalar_select %p386, %s383, 1
        %s388 = smul.addr %s385, 10
        %s389 = sadd.s32 %s387, %s388
        %s390 = smul.addr %s389, 4
        %s391 = scalar_lea.vmem %s3, %s390
        %s392 = smul.u32 2, %s28
        %s393 = smul.u32 32, %s29
        %p394 = scmp.lt.s32.totalorder %s27, 1
        %s395 = scalar_select %p394, %s27, 1
        %p396 = scmp.lt.s32.totalorder %s393, 31
        %s397 = scalar_select %p396, %s393, 31
        %s398 = smul.addr %s395, 32
        %s399 = sadd.s32 %s397, %s398
        %s400 = smul.addr %s399, 4
        %s401 = scalar_lea.vmem %s4, %s400
        %s402 = smul.u32 32, %s29
        %s403 = smul.u32 2, %s29
        %p404 = scmp.lt.s32.totalorder %s27, 1
        %s405 = scalar_select %p404, %s27, 1
        %p406 = scmp.lt.s32.totalorder %s403, 1
        %s407 = scalar_select %p406, %s403, 1
        %s408 = smul.addr %s405, 8
        %s409 = sadd.s32 %s407, %s408
        %s410 = smul.addr %s409, 4
        %s411 = scalar_lea.vmem %s5, %s410
        %s412 = smul.u32 2, %s29
        %s413 = smul.u32 2, %s28
        %p414 = scmp.lt.s32.totalorder %s27, 1
        %s415 = scalar_select %p414, %s27, 1
        %p416 = scmp.lt.s32.totalorder %s413, 1
        %s417 = scalar_select %p416, %s413, 1
        %s418 = smul.addr %s415, 8
        %s419 = sadd.s32 %s417, %s418
        %s420 = smul.addr %s419, 8
        %s421 = scalar_lea.vmem %s6, %s420
        %s422 = smul.u32 2, %s28
        %s423 = smul.u32 2, %s28
        %v425 = vld [vmem:[%s401] sm:$0xf]
        %v426 = vld [vmem:[%s401 + $0x4] sm:$0xf]
        %v427 = vld [vmem:[%s401 + $0x8] sm:$0xf]
        %v428 = vld [vmem:[%s401 + $0xc] sm:$0xf]
        %v429 = vld [vmem:[%s401 + $0x10] sm:$0xf]
        %v430 = vld [vmem:[%s401 + $0x14] sm:$0xf]
        %v431 = vld [vmem:[%s401 + $0x18] sm:$0xf]
        %v432 = vld [vmem:[%s401 + $0x1c] sm:$0xf]
        %v433 = vld [vmem:[%s401 + $0x20] sm:$0xf]
        %v434 = vld [vmem:[%s401 + $0x24] sm:$0xf]
        %v435 = vld [vmem:[%s401 + $0x28] sm:$0xf]
        %v436 = vld [vmem:[%s401 + $0x2c] sm:$0xf]
        %v437 = vld [vmem:[%s401 + $0x30] sm:$0xf]
        %v438 = vld [vmem:[%s401 + $0x34] sm:$0xf]
        %v439 = vld [vmem:[%s401 + $0x38] sm:$0xf]
        %v440 = vld [vmem:[%s401 + $0x3c] sm:$0xf]
        %v441 = vld [vmem:[%s401 + $0x40] sm:$0xf]
        %v442 = vld [vmem:[%s401 + $0x44] sm:$0xf]
        %v443 = vld [vmem:[%s401 + $0x48] sm:$0xf]
        %v444 = vld [vmem:[%s401 + $0x4c] sm:$0xf]
        %v445 = vld [vmem:[%s401 + $0x50] sm:$0xf]
        %v446 = vld [vmem:[%s401 + $0x54] sm:$0xf]
        %v447 = vld [vmem:[%s401 + $0x58] sm:$0xf]
        %v448 = vld [vmem:[%s401 + $0x5c] sm:$0xf]
        %v449 = vld [vmem:[%s401 + $0x60] sm:$0xf]
        %v450 = vld [vmem:[%s401 + $0x64] sm:$0xf]
        %v451 = vld [vmem:[%s401 + $0x68] sm:$0xf]
        %v452 = vld [vmem:[%s401 + $0x6c] sm:$0xf]
        %v453 = vld [vmem:[%s401 + $0x70] sm:$0xf]
        %v454 = vld [vmem:[%s401 + $0x74] sm:$0xf]
        %v455 = vld [vmem:[%s401 + $0x78] sm:$0xf]
        %v456 = vld [vmem:[%s401 + $0x7c] sm:$0xf]
        %v457 = vld [vmem:[%s391] sm:$0xff]
        %v458 = vld [vmem:[%s391 + $0x8] sm:$0xff]
        %v459 = vld [vmem:[%s391 + $0x10] sm:$0xff]
        %v460 = vld [vmem:[%s391 + $0x18] sm:$0xff]
        %v461 = vld [vmem:[%s391 + $0x20] sm:$0xff]
        %v494 = vunpack.c.l.b16 %v425
        %v495 = vunpack.c.l.b16 %v426
        %v496 = vunpack.c.l.b16 %v427
        %v497 = vunpack.c.l.b16 %v428
        %v498 = vunpack.c.l.b16 %v429
        %v499 = vunpack.c.l.b16 %v430
        %v500 = vunpack.c.l.b16 %v431
        %v501 = vunpack.c.l.b16 %v432
        %v502 = vunpack.c.l.b16 %v433
        %v503 = vunpack.c.l.b16 %v434
        %v504 = vunpack.c.l.b16 %v435
        %v505 = vunpack.c.l.b16 %v436
        %v506 = vunpack.c.l.b16 %v437
        %v507 = vunpack.c.l.b16 %v438
        %v508 = vunpack.c.l.b16 %v439
        %v509 = vunpack.c.l.b16 %v440
        %v510 = vunpack.c.l.b16 %v441
        %v511 = vunpack.c.l.b16 %v442
        %v512 = vunpack.c.l.b16 %v443
        %v513 = vunpack.c.l.b16 %v444
        %v514 = vunpack.c.l.b16 %v445
        %v515 = vunpack.c.l.b16 %v446
        %v516 = vunpack.c.l.b16 %v447
        %v517 = vunpack.c.l.b16 %v448
        %v518 = vunpack.c.l.b16 %v449
        %v519 = vunpack.c.l.b16 %v450
        %v520 = vunpack.c.l.b16 %v451
        %v521 = vunpack.c.l.b16 %v452
        %v522 = vunpack.c.l.b16 %v453
        %v523 = vunpack.c.l.b16 %v454
        %v524 = vunpack.c.l.b16 %v455
        %v525 = vunpack.c.l.b16 %v456
        %v526 = vpack.c.b16 %v495, %v494
        %v527 = vpack.c.b16 %v497, %v496
        %v528 = vpack.c.b16 %v499, %v498
        %v529 = vpack.c.b16 %v501, %v500
        %v530 = vpack.c.b16 %v503, %v502
        %v531 = vpack.c.b16 %v505, %v504
        %v532 = vpack.c.b16 %v507, %v506
        %v533 = vpack.c.b16 %v509, %v508
        %v534 = vpack.c.b16 %v511, %v510
        %v535 = vpack.c.b16 %v513, %v512
        %v536 = vpack.c.b16 %v515, %v514
        %v537 = vpack.c.b16 %v517, %v516
        %v538 = vpack.c.b16 %v519, %v518
        %v539 = vpack.c.b16 %v521, %v520
        %v540 = vpack.c.b16 %v523, %v522
        %v541 = vpack.c.b16 %v525, %v524
        %v547 = vunpack.c.l.b16 %v457
        %v548 = vunpack.c.h.b16 %v457
        %v549 = vunpack.c.l.b16 %v458
        %v550 = vunpack.c.h.b16 %v458
        %v551 = vunpack.c.l.b16 %v459
        %v552 = vunpack.c.h.b16 %v459
        %v553 = vunpack.c.l.b16 %v460
        %v554 = vunpack.c.h.b16 %v460
        %v555 = vunpack.c.l.b16 %v461
        %v556 = vunpack.c.h.b16 %v461
        %v557 = vpack.c.b16 %v549, %v547
        %v558 = vpack.c.b16 %v550, %v548
        %v559 = vpack.c.b16 %v553, %v551
        %v560 = vpack.c.b16 %v554, %v552
        %v561 = vpack.c.b16 %v555, %v555
        %v562 = vpack.c.b16 %v556, %v556
        %vm567 = vcmask 326656
        %v569 = vsel %vm567, %v526, 0
        %v572 = vsel %vm567, %v527, 0
        %v575 = vsel %vm567, %v528, 0
        %v578 = vsel %vm567, %v529, 0
        %v581 = vsel %vm567, %v530, 0
        %v584 = vsel %vm567, %v531, 0
        %v587 = vsel %vm567, %v532, 0
        %v590 = vsel %vm567, %v533, 0
        %v593 = vsel %vm567, %v534, 0
        %v596 = vsel %vm567, %v535, 0
        %v599 = vsel %vm567, %v536, 0
        %v602 = vsel %vm567, %v537, 0
        %v605 = vsel %vm567, %v538, 0
        %v608 = vsel %vm567, %v539, 0
        %v611 = vsel %vm567, %v540, 0
        %v614 = vsel %vm567, %v541, 0
        %vm616 = vcmask 1043456
        %v618 = vsel %vm616, %v561, 0
        %v621 = vsel %vm616, %v562, 0
        %623 = vmatprep.subr.bf16.mxu0 %v558
        %624 = vmatpush1.bf16.msra.mxu0 %v557
        %625 = vmatprep.subr.bf16.mxu0 %v560
        %626 = vmatpush1.bf16.msra.mxu0 %v559
        %627 = vmatprep.subr.bf16.mxu0 %v621
        %628 = vmatpush1.bf16.msra.mxu0 %v618
        %629 = vmatprep.subr.bf16.mxu0 0
        %630 = vmatpush1.bf16.msra.mxu0 0
        %631 = vmatprep.subr.bf16.mxu0 0
        %632 = vmatpush1.bf16.msra.mxu0 0
        %633 = vmatprep.subr.bf16.mxu0 0
        %634 = vmatpush1.bf16.msra.mxu0 0
        %635 = vmatprep.subr.bf16.mxu0 0
        %636 = vmatpush1.bf16.msra.mxu0 0
        %637 = vmatprep.subr.bf16.mxu0 0
        %638 = vmatpush1.bf16.msra.mxu0 0
        %639 = vmatprep.subr.bf16.mxu0 0
        %640 = vmatpush1.bf16.msra.mxu0 0
        %641 = vmatprep.subr.bf16.mxu0 0
        %642 = vmatpush1.bf16.msra.mxu0 0
        %643 = vmatprep.subr.bf16.mxu0 0
        %644 = vmatpush1.bf16.msra.mxu0 0
        %645 = vmatprep.subr.bf16.mxu0 0
        %646 = vmatpush1.bf16.msra.mxu0 0
        %647 = vmatprep.subr.bf16.mxu0 0
        %648 = vmatpush1.bf16.msra.mxu0 0
        %649 = vmatprep.subr.bf16.mxu0 0
        %650 = vmatpush1.bf16.msra.mxu0 0
        %651 = vmatprep.subr.bf16.mxu0 0
        %652 = vmatpush1.bf16.msra.mxu0 0
        %653 = vmatprep.subr.bf16.mxu0 0
        %654 = vmatpush1.bf16.msra.mxu0 0
        %655 = vmatprep.mubr.bf16.mxu0 0
        %656 = vmatmul.mubr.bf16.gmra.mrb[0].mxu0 %v569
        %v657 = vpop.f32.mrb[0].mxu0
        %v658 = vadd.f32 0.0, %v657
        %v659 = vpop.f32.mrb[0].mxu0
        %v660 = vadd.f32 0.0, %v659
        %v661 = vpop.f32.mrb[0].mxu0
        %v662 = vadd.f32 0.0, %v661
        %v663 = vpop.f32.mrb[0].mxu0
        %v664 = vadd.f32 0.0, %v663
        %665 = vmatprep.mubr.bf16.mxu0 0
        %666 = vmatmul.mubr.bf16.gmra.mrb[0].mxu0 %v572
        %v667 = vpop.f32.mrb[0].mxu0
        %v668 = vadd.f32 0.0, %v667
        %v669 = vpop.f32.mrb[0].mxu0
        %v670 = vadd.f32 0.0, %v669
        %v671 = vpop.f32.mrb[0].mxu0
        %v672 = vadd.f32 0.0, %v671
        %v673 = vpop.f32.mrb[0].mxu0
        %v674 = vadd.f32 0.0, %v673
        %675 = vmatprep.mubr.bf16.mxu0 0
        %676 = vmatmul.mubr.bf16.gmra.mrb[0].mxu0 %v575
        %v677 = vpop.f32.mrb[0].mxu0
        %v678 = vadd.f32 0.0, %v677
        %v679 = vpop.f32.mrb[0].mxu0
        %v680 = vadd.f32 0.0, %v679
        %v681 = vpop.f32.mrb[0].mxu0
        %v682 = vadd.f32 0.0, %v681
        %v683 = vpop.f32.mrb[0].mxu0
        %v684 = vadd.f32 0.0, %v683
        %685 = vmatprep.mubr.bf16.mxu0 0
        %686 = vmatmul.mubr.bf16.gmra.mrb[0].mxu0 %v578
        %v687 = vpop.f32.mrb[0].mxu0
        %v688 = vadd.f32 0.0, %v687
        %v689 = vpop.f32.mrb[0].mxu0
        %v690 = vadd.f32 0.0, %v689
        %v691 = vpop.f32.mrb[0].mxu0
        %v692 = vadd.f32 0.0, %v691
        %v693 = vpop.f32.mrb[0].mxu0
        %v694 = vadd.f32 0.0, %v693
        %695 = vmatprep.mubr.bf16.mxu0 0
        %696 = vmatmul.mubr.bf16.gmra.mrb[0].mxu0 %v581
        %v697 = vpop.f32.mrb[0].mxu0
        %v698 = vadd.f32 0.0, %v697
        %v699 = vpop.f32.mrb[0].mxu0
        %v700 = vadd.f32 0.0, %v699
        %v701 = vpop.f32.mrb[0].mxu0
        %v702 = vadd.f32 0.0, %v701
        %v703 = vpop.f32.mrb[0].mxu0
        %v704 = vadd.f32 0.0, %v703
        %705 = vmatprep.mubr.bf16.mxu0 0
        %706 = vmatmul.mubr.bf16.gmra.mrb[0].mxu0 %v584
        %v707 = vpop.f32.mrb[0].mxu0
        %v708 = vadd.f32 0.0, %v707
        %v709 = vpop.f32.mrb[0].mxu0
        %v710 = vadd.f32 0.0, %v709
        %v711 = vpop.f32.mrb[0].mxu0
        %v712 = vadd.f32 0.0, %v711
        %v713 = vpop.f32.mrb[0].mxu0
        %v714 = vadd.f32 0.0, %v713
        %715 = vmatprep.mubr.bf16.mxu0 0
        %716 = vmatmul.mubr.bf16.gmra.mrb[0].mxu0 %v587
        %v717 = vpop.f32.mrb[0].mxu0
        %v718 = vadd.f32 0.0, %v717
        %v719 = vpop.f32.mrb[0].mxu0
        %v720 = vadd.f32 0.0, %v719
        %v721 = vpop.f32.mrb[0].mxu0
        %v722 = vadd.f32 0.0, %v721
        %v723 = vpop.f32.mrb[0].mxu0
        %v724 = vadd.f32 0.0, %v723
        %725 = vmatprep.mubr.bf16.mxu0 0
        %726 = vmatmul.mubr.bf16.gmra.mrb[0].mxu0 %v590
        %v727 = vpop.f32.mrb[0].mxu0
        %v728 = vadd.f32 0.0, %v727
        %v729 = vpop.f32.mrb[0].mxu0
        %v730 = vadd.f32 0.0, %v729
        %v731 = vpop.f32.mrb[0].mxu0
        %v732 = vadd.f32 0.0, %v731
        %v733 = vpop.f32.mrb[0].mxu0
        %v734 = vadd.f32 0.0, %v733
        %735 = vmatprep.mubr.bf16.mxu0 0
        %736 = vmatmul.mubr.bf16.gmra.mrb[0].mxu0 %v593
        %v737 = vpop.f32.mrb[0].mxu0
        %v738 = vadd.f32 0.0, %v737
        %v739 = vpop.f32.mrb[0].mxu0
        %v740 = vadd.f32 0.0, %v739
        %v741 = vpop.f32.mrb[0].mxu0
        %v742 = vadd.f32 0.0, %v741
        %v743 = vpop.f32.mrb[0].mxu0
        %v744 = vadd.f32 0.0, %v743
        %745 = vmatprep.mubr.bf16.mxu0 0
        %746 = vmatmul.mubr.bf16.gmra.mrb[0].mxu0 %v596
        %v747 = vpop.f32.mrb[0].mxu0
        %v748 = vadd.f32 0.0, %v747
        %v749 = vpop.f32.mrb[0].mxu0
        %v750 = vadd.f32 0.0, %v749
        %v751 = vpop.f32.mrb[0].mxu0
        %v752 = vadd.f32 0.0, %v751
        %v753 = vpop.f32.mrb[0].mxu0
        %v754 = vadd.f32 0.0, %v753
        %755 = vmatprep.mubr.bf16.mxu0 0
        %756 = vmatmul.mubr.bf16.gmra.mrb[0].mxu0 %v599
        %v757 = vpop.f32.mrb[0].mxu0
        %v758 = vadd.f32 0.0, %v757
        %v759 = vpop.f32.mrb[0].mxu0
        %v760 = vadd.f32 0.0, %v759
        %v761 = vpop.f32.mrb[0].mxu0
        %v762 = vadd.f32 0.0, %v761
        %v763 = vpop.f32.mrb[0].mxu0
        %v764 = vadd.f32 0.0, %v763
        %765 = vmatprep.mubr.bf16.mxu0 0
        %766 = vmatmul.mubr.bf16.gmra.mrb[0].mxu0 %v602
        %v767 = vpop.f32.mrb[0].mxu0
        %v768 = vadd.f32 0.0, %v767
        %v769 = vpop.f32.mrb[0].mxu0
        %v770 = vadd.f32 0.0, %v769
        %v771 = vpop.f32.mrb[0].mxu0
        %v772 = vadd.f32 0.0, %v771
        %v773 = vpop.f32.mrb[0].mxu0
        %v774 = vadd.f32 0.0, %v773
        %775 = vmatprep.mubr.bf16.mxu0 0
        %776 = vmatmul.mubr.bf16.gmra.mrb[0].mxu0 %v605
        %v777 = vpop.f32.mrb[0].mxu0
        %v778 = vadd.f32 0.0, %v777
        %v779 = vpop.f32.mrb[0].mxu0
        %v780 = vadd.f32 0.0, %v779
        %v781 = vpop.f32.mrb[0].mxu0
        %v782 = vadd.f32 0.0, %v781
        %v783 = vpop.f32.mrb[0].mxu0
        %v784 = vadd.f32 0.0, %v783
        %785 = vmatprep.mubr.bf16.mxu0 0
        %786 = vmatmul.mubr.bf16.gmra.mrb[0].mxu0 %v608
        %v787 = vpop.f32.mrb[0].mxu0
        %v788 = vadd.f32 0.0, %v787
        %v789 = vpop.f32.mrb[0].mxu0
        %v790 = vadd.f32 0.0, %v789
        %v791 = vpop.f32.mrb[0].mxu0
        %v792 = vadd.f32 0.0, %v791
        %v793 = vpop.f32.mrb[0].mxu0
        %v794 = vadd.f32 0.0, %v793
        %795 = vmatprep.mubr.bf16.mxu0 0
        %796 = vmatmul.mubr.bf16.gmra.mrb[0].mxu0 %v611
        %v797 = vpop.f32.mrb[0].mxu0
        %v798 = vadd.f32 0.0, %v797
        %v799 = vpop.f32.mrb[0].mxu0
        %v800 = vadd.f32 0.0, %v799
        %v801 = vpop.f32.mrb[0].mxu0
        %v802 = vadd.f32 0.0, %v801
        %v803 = vpop.f32.mrb[0].mxu0
        %v804 = vadd.f32 0.0, %v803
        %805 = vmatprep.mubr.bf16.mxu0 0
        %806 = vmatmul.mubr.bf16.gmra.mrb[0].mxu0 %v614
        %v807 = vpop.f32.mrb[0].mxu0
        %v808 = vadd.f32 0.0, %v807
        %v809 = vpop.f32.mrb[0].mxu0
        %v810 = vadd.f32 0.0, %v809
        %v811 = vpop.f32.mrb[0].mxu0
        %v812 = vadd.f32 0.0, %v811
        %v813 = vpop.f32.mrb[0].mxu0
        %v814 = vadd.f32 0.0, %v813
        %815 = vdwg.mxu0
        %v816 = vmax.f32 %v658, %v668
        %v817 = vmax.f32 %v662, %v672
        %v818 = vmax.f32 %v816, %v678
        %v819 = vmax.f32 %v817, %v682
        %v820 = vmax.f32 %v818, %v688
        %v821 = vmax.f32 %v819, %v692
        %v822 = vmax.f32 %v820, %v698
        %v823 = vmax.f32 %v821, %v702
        %v824 = vmax.f32 %v822, %v708
        %v825 = vmax.f32 %v823, %v712
        %v826 = vmax.f32 %v824, %v718
        %v827 = vmax.f32 %v825, %v722
        %v828 = vmax.f32 %v826, %v728
        %v829 = vmax.f32 %v827, %v732
        %v830 = vmax.f32 %v828, %v738
        %v831 = vmax.f32 %v829, %v742
        %v832 = vmax.f32 %v830, %v748
        %v833 = vmax.f32 %v831, %v752
        %v834 = vmax.f32 %v832, %v758
        %v835 = vmax.f32 %v833, %v762
        %v836 = vmax.f32 %v834, %v768
        %v837 = vmax.f32 %v835, %v772
        %v838 = vmax.f32 %v836, %v778
        %v839 = vmax.f32 %v837, %v782
        %v840 = vmax.f32 %v838, %v788
        %v841 = vmax.f32 %v839, %v792
        %v842 = vmax.f32 %v840, %v798
        %v843 = vmax.f32 %v841, %v802
        %v844 = vmax.f32 %v842, %v808
        %v845 = vmax.f32 %v843, %v812
        %v846 = vmax.f32 %v844, %v845
        %v847 = vrot.slane %v846, 4
        %v848 = vmax.f32 %v846, %v847
        %v849 = vrot.slane %v848, 2
        %v850 = vmax.f32 %v848, %v849
        %v851 = vrot.slane %v850, 1
        %v852 = vmax.f32 %v850, %v851
        %v853 = vmax.f32 %v660, %v670
        %v854 = vmax.f32 %v664, %v674
        %v855 = vmax.f32 %v853, %v680
        %v856 = vmax.f32 %v854, %v684
        %v857 = vmax.f32 %v855, %v690
        %v858 = vmax.f32 %v856, %v694
        %v859 = vmax.f32 %v857, %v700
        %v860 = vmax.f32 %v858, %v704
        %v861 = vmax.f32 %v859, %v710
        %v862 = vmax.f32 %v860, %v714
        %v863 = vmax.f32 %v861, %v720
        %v864 = vmax.f32 %v862, %v724
        %v865 = vmax.f32 %v863, %v730
        %v866 = vmax.f32 %v864, %v734
        %v867 = vmax.f32 %v865, %v740
        %v868 = vmax.f32 %v866, %v744
        %v869 = vmax.f32 %v867, %v750
        %v870 = vmax.f32 %v868, %v754
        %v871 = vmax.f32 %v869, %v760
        %v872 = vmax.f32 %v870, %v764
        %v873 = vmax.f32 %v871, %v770
        %v874 = vmax.f32 %v872, %v774
        %v875 = vmax.f32 %v873, %v780
        %v876 = vmax.f32 %v874, %v784
        %v877 = vmax.f32 %v875, %v790
        %v878 = vmax.f32 %v876, %v794
        %v879 = vmax.f32 %v877, %v800
        %v880 = vmax.f32 %v878, %v804
        %v881 = vmax.f32 %v879, %v810
        %v882 = vmax.f32 %v880, %v814
        %v883 = vmax.f32 %v881, %v882
        %v884 = vrot.slane %v883, 4
        %v885 = vmax.f32 %v883, %v884
        %v886 = vrot.slane %v885, 2
        %v887 = vmax.f32 %v885, %v886
        %v888 = vrot.slane %v887, 1
        %v889 = vmax.f32 %v887, %v888
        %v890 = vsub.f32 %v658, %v852
        %v891 = vsub.f32 %v660, %v889
        %v892 = vsub.f32 %v662, %v852
        %v893 = vsub.f32 %v664, %v889
        %v894 = vsub.f32 %v668, %v852
        %v895 = vsub.f32 %v670, %v889
        %v896 = vsub.f32 %v672, %v852
        %v897 = vsub.f32 %v674, %v889
        %v898 = vsub.f32 %v678, %v852
        %v899 = vsub.f32 %v680, %v889
        %v900 = vsub.f32 %v682, %v852
        %v901 = vsub.f32 %v684, %v889
        %v902 = vsub.f32 %v688, %v852
        %v903 = vsub.f32 %v690, %v889
        %v904 = vsub.f32 %v692, %v852
        %v905 = vsub.f32 %v694, %v889
        %v906 = vsub.f32 %v698, %v852
        %v907 = vsub.f32 %v700, %v889
        %v908 = vsub.f32 %v702, %v852
        %v909 = vsub.f32 %v704, %v889
        %v910 = vsub.f32 %v708, %v852
        %v911 = vsub.f32 %v710, %v889
        %v912 = vsub.f32 %v712, %v852
        %v913 = vsub.f32 %v714, %v889
        %v914 = vsub.f32 %v718, %v852
        %v915 = vsub.f32 %v720, %v889
        %v916 = vsub.f32 %v722, %v852
        %v917 = vsub.f32 %v724, %v889
        %v918 = vsub.f32 %v728, %v852
        %v919 = vsub.f32 %v730, %v889
        %v920 = vsub.f32 %v732, %v852
        %v921 = vsub.f32 %v734, %v889
        %v922 = vsub.f32 %v738, %v852
        %v923 = vsub.f32 %v740, %v889
        %v924 = vsub.f32 %v742, %v852
        %v925 = vsub.f32 %v744, %v889
        %v926 = vsub.f32 %v748, %v852
        %v927 = vsub.f32 %v750, %v889
        %v928 = vsub.f32 %v752, %v852
        %v929 = vsub.f32 %v754, %v889
        %v930 = vsub.f32 %v758, %v852
        %v931 = vsub.f32 %v760, %v889
        %v932 = vsub.f32 %v762, %v852
        %v933 = vsub.f32 %v764, %v889
        %v934 = vsub.f32 %v768, %v852
        %v935 = vsub.f32 %v770, %v889
        %v936 = vsub.f32 %v772, %v852
        %v937 = vsub.f32 %v774, %v889
        %v938 = vsub.f32 %v778, %v852
        %v939 = vsub.f32 %v780, %v889
        %v940 = vsub.f32 %v782, %v852
        %v941 = vsub.f32 %v784, %v889
        %v942 = vsub.f32 %v788, %v852
        %v943 = vsub.f32 %v790, %v889
        %v944 = vsub.f32 %v792, %v852
        %v945 = vsub.f32 %v794, %v889
        %v946 = vsub.f32 %v798, %v852
        %v947 = vsub.f32 %v800, %v889
        %v948 = vsub.f32 %v802, %v852
        %v949 = vsub.f32 %v804, %v889
        %v950 = vsub.f32 %v808, %v852
        %v951 = vsub.f32 %v810, %v889
        %v952 = vsub.f32 %v812, %v852
        %v953 = vsub.f32 %v814, %v889
        %v954 = vmul.f32 %v890, 1.442695
        %v955 = vpow.pop %v954
        %v956 = vmul.f32 %v891, 1.442695
        %v957 = vpow.pop %v956
        %v958 = vmul.f32 %v892, 1.442695
        %v959 = vpow.pop %v958
        %v960 = vmul.f32 %v893, 1.442695
        %v961 = vpow.pop %v960
        %v962 = vmul.f32 %v894, 1.442695
        %v963 = vpow.pop %v962
        %v964 = vmul.f32 %v895, 1.442695
        %v965 = vpow.pop %v964
        %v966 = vmul.f32 %v896, 1.442695
        %v967 = vpow.pop %v966
        %v968 = vmul.f32 %v897, 1.442695
        %v969 = vpow.pop %v968
        %v970 = vmul.f32 %v898, 1.442695
        %v971 = vpow.pop %v970
        %v972 = vmul.f32 %v899, 1.442695
        %v973 = vpow.pop %v972
        %v974 = vmul.f32 %v900, 1.442695
        %v975 = vpow.pop %v974
        %v976 = vmul.f32 %v901, 1.442695
        %v977 = vpow.pop %v976
        %v978 = vmul.f32 %v902, 1.442695
        %v979 = vpow.pop %v978
        %v980 = vmul.f32 %v903, 1.442695
        %v981 = vpow.pop %v980
        %v982 = vmul.f32 %v904, 1.442695
        %v983 = vpow.pop %v982
        %v984 = vmul.f32 %v905, 1.442695
        %v985 = vpow.pop %v984
        %v986 = vmul.f32 %v906, 1.442695
        %v987 = vpow.pop %v986
        %v988 = vmul.f32 %v907, 1.442695
        %v989 = vpow.pop %v988
        %v990 = vmul.f32 %v908, 1.442695
        %v991 = vpow.pop %v990
        %v992 = vmul.f32 %v909, 1.442695
        %v993 = vpow.pop %v992
        %v994 = vmul.f32 %v910, 1.442695
        %v995 = vpow.pop %v994
        %v996 = vmul.f32 %v911, 1.442695
        %v997 = vpow.pop %v996
        %v998 = vmul.f32 %v912, 1.442695
        %v999 = vpow.pop %v998
        %v1000 = vmul.f32 %v913, 1.442695
        %v1001 = vpow.pop %v1000
        %v1002 = vmul.f32 %v914, 1.442695
        %v1003 = vpow.pop %v1002
        %v1004 = vmul.f32 %v915, 1.442695
        %v1005 = vpow.pop %v1004
        %v1006 = vmul.f32 %v916, 1.442695
        %v1007 = vpow.pop %v1006
        %v1008 = vmul.f32 %v917, 1.442695
        %v1009 = vpow.pop %v1008
        %v1010 = vmul.f32 %v918, 1.442695
        %v1011 = vpow.pop %v1010
        %v1012 = vmul.f32 %v919, 1.442695
        %v1013 = vpow.pop %v1012
        %v1014 = vmul.f32 %v920, 1.442695
        %v1015 = vpow.pop %v1014
        %v1016 = vmul.f32 %v921, 1.442695
        %v1017 = vpow.pop %v1016
        %v1018 = vmul.f32 %v922, 1.442695
        %v1019 = vpow.pop %v1018
        %v1020 = vmul.f32 %v923, 1.442695
        %v1021 = vpow.pop %v1020
        %v1022 = vmul.f32 %v924, 1.442695
        %v1023 = vpow.pop %v1022
        %v1024 = vmul.f32 %v925, 1.442695
        %v1025 = vpow.pop %v1024
        %v1026 = vmul.f32 %v926, 1.442695
        %v1027 = vpow.pop %v1026
        %v1028 = vmul.f32 %v927, 1.442695
        %v1029 = vpow.pop %v1028
        %v1030 = vmul.f32 %v928, 1.442695
        %v1031 = vpow.pop %v1030
        %v1032 = vmul.f32 %v929, 1.442695
        %v1033 = vpow.pop %v1032
        %v1034 = vmul.f32 %v930, 1.442695
        %v1035 = vpow.pop %v1034
        %v1036 = vmul.f32 %v931, 1.442695
        %v1037 = vpow.pop %v1036
        %v1038 = vmul.f32 %v932, 1.442695
        %v1039 = vpow.pop %v1038
        %v1040 = vmul.f32 %v933, 1.442695
        %v1041 = vpow.pop %v1040
        %v1042 = vmul.f32 %v934, 1.442695
        %v1043 = vpow.pop %v1042
        %v1044 = vmul.f32 %v935, 1.442695
        %v1045 = vpow.pop %v1044
        %v1046 = vmul.f32 %v936, 1.442695
        %v1047 = vpow.pop %v1046
        %v1048 = vmul.f32 %v937, 1.442695
        %v1049 = vpow.pop %v1048
        %v1050 = vmul.f32 %v938, 1.442695
        %v1051 = vpow.pop %v1050
        %v1052 = vmul.f32 %v939, 1.442695
        %v1053 = vpow.pop %v1052
        %v1054 = vmul.f32 %v940, 1.442695
        %v1055 = vpow.pop %v1054
        %v1056 = vmul.f32 %v941, 1.442695
        %v1057 = vpow.pop %v1056
        %v1058 = vmul.f32 %v942, 1.442695
        %v1059 = vpow.pop %v1058
        %v1060 = vmul.f32 %v943, 1.442695
        %v1061 = vpow.pop %v1060
        %v1062 = vmul.f32 %v944, 1.442695
        %v1063 = vpow.pop %v1062
        %v1064 = vmul.f32 %v945, 1.442695
        %v1065 = vpow.pop %v1064
        %v1066 = vmul.f32 %v946, 1.442695
        %v1067 = vpow.pop %v1066
        %v1068 = vmul.f32 %v947, 1.442695
        %v1069 = vpow.pop %v1068
        %v1070 = vmul.f32 %v948, 1.442695
        %v1071 = vpow.pop %v1070
        %v1072 = vmul.f32 %v949, 1.442695
        %v1073 = vpow.pop %v1072
        %v1074 = vmul.f32 %v950, 1.442695
        %v1075 = vpow.pop %v1074
        %v1076 = vmul.f32 %v951, 1.442695
        %v1077 = vpow.pop %v1076
        %v1078 = vmul.f32 %v952, 1.442695
        %v1079 = vpow.pop %v1078
        %v1080 = vmul.f32 %v953, 1.442695
        %v1081 = vpow.pop %v1080
        %v1082 = vadd.f32 %v955, %v959
        %v1083 = vadd.f32 %v1082, %v963
        %v1084 = vadd.f32 %v1083, %v967
        %v1085 = vadd.f32 %v1084, %v971
        %v1086 = vadd.f32 %v1085, %v975
        %v1087 = vadd.f32 %v1086, %v979
        %v1088 = vadd.f32 %v1087, %v983
        %v1089 = vadd.f32 %v1088, %v987
        %v1090 = vadd.f32 %v1089, %v991
        %v1091 = vadd.f32 %v1090, %v995
        %v1092 = vadd.f32 %v1091, %v999
        %v1093 = vadd.f32 %v1092, %v1003
        %v1094 = vadd.f32 %v1093, %v1007
        %v1095 = vadd.f32 %v1094, %v1011
        %v1096 = vadd.f32 %v1095, %v1015
        %v1097 = vadd.f32 %v1096, %v1019
        %v1098 = vadd.f32 %v1097, %v1023
        %v1099 = vadd.f32 %v1098, %v1027
        %v1100 = vadd.f32 %v1099, %v1031
        %v1101 = vadd.f32 %v1100, %v1035
        %v1102 = vadd.f32 %v1101, %v1039
        %v1103 = vadd.f32 %v1102, %v1043
        %v1104 = vadd.f32 %v1103, %v1047
        %v1105 = vadd.f32 %v1104, %v1051
        %v1106 = vadd.f32 %v1105, %v1055
        %v1107 = vadd.f32 %v1106, %v1059
        %v1108 = vadd.f32 %v1107, %v1063
        %v1109 = vadd.f32 %v1108, %v1067
        %v1110 = vadd.f32 %v1109, %v1071
        %v1111 = vadd.f32 %v1110, %v1075
        %v1112 = vadd.f32 %v1111, %v1079
        %v1113 = vrot.slane %v1112, 4
        %v1114 = vadd.f32 %v1112, %v1113
        %v1115 = vrot.slane %v1114, 2
        %v1116 = vadd.f32 %v1114, %v1115
        %v1117 = vrot.slane %v1116, 1
        %v1118 = vadd.f32 %v1116, %v1117
        %v1119 = vadd.f32 %v957, %v961
        %v1120 = vadd.f32 %v1119, %v965
        %v1121 = vadd.f32 %v1120, %v969
        %v1122 = vadd.f32 %v1121, %v973
        %v1123 = vadd.f32 %v1122, %v977
        %v1124 = vadd.f32 %v1123, %v981
        %v1125 = vadd.f32 %v1124, %v985
        %v1126 = vadd.f32 %v1125, %v989
        %v1127 = vadd.f32 %v1126, %v993
        %v1128 = vadd.f32 %v1127, %v997
        %v1129 = vadd.f32 %v1128, %v1001
        %v1130 = vadd.f32 %v1129, %v1005
        %v1131 = vadd.f32 %v1130, %v1009
        %v1132 = vadd.f32 %v1131, %v1013
        %v1133 = vadd.f32 %v1132, %v1017
        %v1134 = vadd.f32 %v1133, %v1021
        %v1135 = vadd.f32 %v1134, %v1025
        %v1136 = vadd.f32 %v1135, %v1029
        %v1137 = vadd.f32 %v1136, %v1033
        %v1138 = vadd.f32 %v1137, %v1037
        %v1139 = vadd.f32 %v1138, %v1041
        %v1140 = vadd.f32 %v1139, %v1045
        %v1141 = vadd.f32 %v1140, %v1049
        %v1142 = vadd.f32 %v1141, %v1053
        %v1143 = vadd.f32 %v1142, %v1057
        %v1144 = vadd.f32 %v1143, %v1061
        %v1145 = vadd.f32 %v1144, %v1065
        %v1146 = vadd.f32 %v1145, %v1069
        %v1147 = vadd.f32 %v1146, %v1073
        %v1148 = vadd.f32 %v1147, %v1077
        %v1149 = vadd.f32 %v1148, %v1081
        %v1150 = vrot.slane %v1149, 4
        %v1151 = vadd.f32 %v1149, %v1150
        %v1152 = vrot.slane %v1151, 2
        %v1153 = vadd.f32 %v1151, %v1152
        %v1154 = vrot.slane %v1153, 1
        %v1155 = vadd.f32 %v1153, %v1154
        %v1156 = vld [vmem:[%s411] sm:$0xff]
        %v1157 = vld [vmem:[%s411 + $0x8] sm:$0xff]
        %v1158 = vld [vmem:[%s411 + $0x10] sm:$0xff]
        %v1159 = vld [vmem:[%s411 + $0x18] sm:$0xff]
        %v1160 = vpack.c.bf16 %v959, %v955
        %v1161 = vpack.c.bf16 %v961, %v957
        %v1162 = vpack.c.bf16 %v967, %v963
        %v1163 = vpack.c.bf16 %v969, %v965
        %v1164 = vpack.c.bf16 %v975, %v971
        %v1165 = vpack.c.bf16 %v977, %v973
        %v1166 = vpack.c.bf16 %v983, %v979
        %v1167 = vpack.c.bf16 %v985, %v981
        %v1168 = vpack.c.bf16 %v991, %v987
        %v1169 = vpack.c.bf16 %v993, %v989
        %v1170 = vpack.c.bf16 %v999, %v995
        %v1171 = vpack.c.bf16 %v1001, %v997
        %v1172 = vpack.c.bf16 %v1007, %v1003
        %v1173 = vpack.c.bf16 %v1009, %v1005
        %v1174 = vpack.c.bf16 %v1015, %v1011
        %v1175 = vpack.c.bf16 %v1017, %v1013
        %v1176 = vpack.c.bf16 %v1023, %v1019
        %v1177 = vpack.c.bf16 %v1025, %v1021
        %v1178 = vpack.c.bf16 %v1031, %v1027
        %v1179 = vpack.c.bf16 %v1033, %v1029
        %v1180 = vpack.c.bf16 %v1039, %v1035
        %v1181 = vpack.c.bf16 %v1041, %v1037
        %v1182 = vpack.c.bf16 %v1047, %v1043
        %v1183 = vpack.c.bf16 %v1049, %v1045
        %v1184 = vpack.c.bf16 %v1055, %v1051
        %v1185 = vpack.c.bf16 %v1057, %v1053
        %v1186 = vpack.c.bf16 %v1063, %v1059
        %v1187 = vpack.c.bf16 %v1065, %v1061
        %v1188 = vpack.c.bf16 %v1071, %v1067
        %v1189 = vpack.c.bf16 %v1073, %v1069
        %v1190 = vpack.c.bf16 %v1079, %v1075
        %v1191 = vpack.c.bf16 %v1081, %v1077
        %v1196 = vunpack.c.l.b16 %v1156
        %v1197 = vunpack.c.h.b16 %v1156
        %v1198 = vunpack.c.l.b16 %v1157
        %v1199 = vunpack.c.h.b16 %v1157
        %v1200 = vunpack.c.l.b16 %v1158
        %v1201 = vunpack.c.h.b16 %v1158
        %v1202 = vunpack.c.l.b16 %v1159
        %v1203 = vunpack.c.h.b16 %v1159
        %v1204 = vpack.c.b16 %v1198, %v1196
        %v1205 = vpack.c.b16 %v1199, %v1197
        %v1206 = vpack.c.b16 %v1202, %v1200
        %v1207 = vpack.c.b16 %v1203, %v1201
        %1212 = vmatprep.subr.bf16.mxu0 %v1161
        %1213 = vmatpush1.bf16.msra.mxu0 %v1160
        %1214 = vmatprep.subr.bf16.mxu0 %v1163
        %1215 = vmatpush1.bf16.msra.mxu0 %v1162
        %1216 = vmatprep.subr.bf16.mxu0 %v1165
        %1217 = vmatpush1.bf16.msra.mxu0 %v1164
        %1218 = vmatprep.subr.bf16.mxu0 %v1167
        %1219 = vmatpush1.bf16.msra.mxu0 %v1166
        %1220 = vmatprep.subr.bf16.mxu0 %v1169
        %1221 = vmatpush1.bf16.msra.mxu0 %v1168
        %1222 = vmatprep.subr.bf16.mxu0 %v1171
        %1223 = vmatpush1.bf16.msra.mxu0 %v1170
        %1224 = vmatprep.subr.bf16.mxu0 %v1173
        %1225 = vmatpush1.bf16.msra.mxu0 %v1172
        %1226 = vmatprep.subr.bf16.mxu0 %v1175
        %1227 = vmatpush1.bf16.msra.mxu0 %v1174
        %1228 = vmatprep.subr.bf16.mxu0 %v1177
        %1229 = vmatpush1.bf16.msra.mxu0 %v1176
        %1230 = vmatprep.subr.bf16.mxu0 %v1179
        %1231 = vmatpush1.bf16.msra.mxu0 %v1178
        %1232 = vmatprep.subr.bf16.mxu0 %v1181
        %1233 = vmatpush1.bf16.msra.mxu0 %v1180
        %1234 = vmatprep.subr.bf16.mxu0 %v1183
        %1235 = vmatpush1.bf16.msra.mxu0 %v1182
        %1236 = vmatprep.subr.bf16.mxu0 %v1185
        %1237 = vmatpush1.bf16.msra.mxu0 %v1184
        %1238 = vmatprep.subr.bf16.mxu0 %v1187
        %1239 = vmatpush1.bf16.msra.mxu0 %v1186
        %1240 = vmatprep.subr.bf16.mxu0 %v1189
        %1241 = vmatpush1.bf16.msra.mxu0 %v1188
        %1242 = vmatprep.subr.bf16.mxu0 %v1191
        %1243 = vmatpush1.bf16.msra.mxu0 %v1190
        %1244 = vmatprep.mubr.bf16.mxu0 %v1205
        %1245 = vmatmul.mubr.bf16.gmra.mrb[0].mxu0 %v1204
        %v1246 = vpop.f32.mrb[0].mxu0
        %v1247 = vadd.f32 0.0, %v1246
        %v1248 = vpop.f32.mrb[0].mxu0
        %v1249 = vadd.f32 0.0, %v1248
        %v1250 = vpop.f32.mrb[0].mxu0
        %v1251 = vadd.f32 0.0, %v1250
        %v1252 = vpop.f32.mrb[0].mxu0
        %v1253 = vadd.f32 0.0, %v1252
        %1254 = vmatprep.mubr.bf16.mxu0 %v1207
        %1255 = vmatmul.mubr.bf16.gmra.mrb[0].mxu0 %v1206
        %v1256 = vpop.f32.mrb[0].mxu0
        %v1257 = vadd.f32 0.0, %v1256
        %v1258 = vpop.f32.mrb[0].mxu0
        %v1259 = vadd.f32 0.0, %v1258
        %v1260 = vpop.f32.mrb[0].mxu0
        %v1261 = vadd.f32 0.0, %v1260
        %v1262 = vpop.f32.mrb[0].mxu0
        %v1263 = vadd.f32 0.0, %v1262
        %1264 = vdwg.mxu0
        %v1265 = vrcp.pop %v1118
        %v1266 = vrcp.pop %v1155
        %v1267 = vmul.f32 %v1247, %v1265
        %v1268 = vmul.f32 %v1249, %v1266
        %v1269 = vmul.f32 %v1251, %v1265
        %v1270 = vmul.f32 %v1253, %v1266
        %v1271 = vmul.f32 %v1257, %v1265
        %v1272 = vmul.f32 %v1259, %v1266
        %v1273 = vmul.f32 %v1261, %v1265
        %v1274 = vmul.f32 %v1263, %v1266
        %v1275 = vpack.c.bf16 %v1269, %v1267
        %v1276 = vpack.c.bf16 %v1270, %v1268
        %v1277 = vpack.c.bf16 %v1273, %v1271
        %v1278 = vpack.c.bf16 %v1274, %v1272
        %v1279 = vld [vmem:[%s0] sm:$0xf]
        %v1280 = vld [vmem:[%s0 + $0x4] sm:$0xf]
        %v1281 = vld [vmem:[%s0 + $0x8] sm:$0xf]
        %v1282 = vld [vmem:[%s0 + $0xc] sm:$0xf]
        %v1283 = vld [vmem:[%s1] sm:$0xff]
        %v1284 = vld [vmem:[%s1 + $0x8] sm:$0xff]
        %v1285 = vld [vmem:[%s1 + $0x10] sm:$0xff]
        %v1286 = vld [vmem:[%s1 + $0x18] sm:$0xff]
        %1288 = vset.pattern.permute.xlu0 0
        %1289 = vperm.xlu0 %1288, %v1283
        %v1290 = vpop.permute.xlu0 %1289
        %1293 = vset.pattern.permute.xlu0 0
        %1294 = vperm.xlu0 %1293, %v1284
        %v1295 = vpop.permute.xlu0 %1294
        %1298 = vset.pattern.permute.xlu0 0
        %1299 = vperm.xlu0 %1298, %v1285
        %v1300 = vpop.permute.xlu0 %1299
        %1303 = vset.pattern.permute.xlu0 0
        %1304 = vperm.xlu0 %1303, %v1286
        %v1305 = vpop.permute.xlu0 %1304
        %v1311 = vunpack.c.l.b16 %v1279
        %v1312 = vunpack.c.l.b16 %v1280
        %v1313 = vunpack.c.l.b16 %v1281
        %v1314 = vunpack.c.l.b16 %v1282
        %v1315 = vpack.c.b16 %v1312, %v1311
        %v1316 = vpack.c.b16 %v1314, %v1313
        %vm1317 = vcmask 261120
        %v1319 = vsel %vm1317, %v1315, 0
        %v1322 = vsel %vm1317, %v1316, 0
        %1324 = vmatprep.subr.bf16.mxu0 %v1276
        %1325 = vmatpush1.bf16.msra.mxu0 %v1275
        %1326 = vmatprep.subr.bf16.mxu0 %v1278
        %1327 = vmatpush1.bf16.msra.mxu0 %v1277
        %1328 = vmatprep.subr.bf16.mxu0 0
        %1329 = vmatpush1.bf16.msra.mxu0 0
        %1330 = vmatprep.subr.bf16.mxu0 0
        %1331 = vmatpush1.bf16.msra.mxu0 0
        %1332 = vmatprep.subr.bf16.mxu0 0
        %1333 = vmatpush1.bf16.msra.mxu0 0
        %1334 = vmatprep.subr.bf16.mxu0 0
        %1335 = vmatpush1.bf16.msra.mxu0 0
        %1336 = vmatprep.subr.bf16.mxu0 0
        %1337 = vmatpush1.bf16.msra.mxu0 0
        %1338 = vmatprep.subr.bf16.mxu0 0
        %1339 = vmatpush1.bf16.msra.mxu0 0
        %1340 = vmatprep.subr.bf16.mxu0 0
        %1341 = vmatpush1.bf16.msra.mxu0 0
        %1342 = vmatprep.subr.bf16.mxu0 0
        %1343 = vmatpush1.bf16.msra.mxu0 0
        %1344 = vmatprep.subr.bf16.mxu0 0
        %1345 = vmatpush1.bf16.msra.mxu0 0
        %1346 = vmatprep.subr.bf16.mxu0 0
        %1347 = vmatpush1.bf16.msra.mxu0 0
        %1348 = vmatprep.subr.bf16.mxu0 0
        %1349 = vmatpush1.bf16.msra.mxu0 0
        %1350 = vmatprep.subr.bf16.mxu0 0
        %1351 = vmatpush1.bf16.msra.mxu0 0
        %1352 = vmatprep.subr.bf16.mxu0 0
        %1353 = vmatpush1.bf16.msra.mxu0 0
        %1354 = vmatprep.subr.bf16.mxu0 0
        %1355 = vmatpush1.bf16.msra.mxu0 0
        %1356 = vmatprep.mubr.bf16.mxu0 0
        %1357 = vmatmul.mubr.bf16.gmra.mrb[0].mxu0 %v1319
        %v1358 = vpop.f32.mrb[0].mxu0
        %v1359 = vadd.f32 %v1290, %v1358
        %v1360 = vpop.f32.mrb[0].mxu0
        %v1361 = vadd.f32 %v1290, %v1360
        %v1362 = vpop.f32.mrb[0].mxu0
        %v1363 = vadd.f32 %v1295, %v1362
        %v1364 = vpop.f32.mrb[0].mxu0
        %v1365 = vadd.f32 %v1295, %v1364
        %1366 = vmatprep.mubr.bf16.mxu0 0
        %1367 = vmatmul.mubr.bf16.gmra.mrb[0].mxu0 %v1322
        %v1368 = vpop.f32.mrb[0].mxu0
        %v1369 = vadd.f32 %v1300, %v1368
        %v1370 = vpop.f32.mrb[0].mxu0
        %v1371 = vadd.f32 %v1300, %v1370
        %v1372 = vpop.f32.mrb[0].mxu0
        %v1373 = vadd.f32 %v1305, %v1372
        %v1374 = vpop.f32.mrb[0].mxu0
        %v1375 = vadd.f32 %v1305, %v1374
        %1376 = vdwg.mxu0
        %s1377 = sld [smem:[#allocation2]]
        %v1378 = vstv %s1377
        %v1379 = vmul.f32 %v1378, %v1359
        %v1380 = vmul.f32 %v1378, %v1361
        %v1381 = vmul.f32 %v1378, %v1363
        %v1382 = vmul.f32 %v1378, %v1365
        %v1383 = vmul.f32 %v1378, %v1369
        %v1384 = vmul.f32 %v1378, %v1371
        %v1385 = vmul.f32 %v1378, %v1373
        %v1386 = vmul.f32 %v1378, %v1375
        %v1387 = vld [vmem:[%s421] sm:$0xff]
        %v1388 = vld [vmem:[%s421 + $0x8] sm:$0xff]
        %v1389 = vld [vmem:[%s421 + $0x10] sm:$0xff]
        %v1390 = vld [vmem:[%s421 + $0x18] sm:$0xff]
        %v1391 = vld [vmem:[%s421 + $0x20] sm:$0xff]
        %v1392 = vld [vmem:[%s421 + $0x28] sm:$0xff]
        %v1393 = vld [vmem:[%s421 + $0x30] sm:$0xff]
        %v1394 = vld [vmem:[%s421 + $0x38] sm:$0xff]
        %v1395 = vadd.f32 %v1379, %v1387
        %v1396 = vadd.f32 %v1380, %v1388
        %v1397 = vadd.f32 %v1381, %v1389
        %v1398 = vadd.f32 %v1382, %v1390
        %v1399 = vadd.f32 %v1383, %v1391
        %v1400 = vadd.f32 %v1384, %v1392
        %v1401 = vadd.f32 %v1385, %v1393
        %v1402 = vadd.f32 %v1386, %v1394
        %1403 = vst [vmem:[%s382] sm:$0xff] %v1395
        %1404 = vst [vmem:[%s382 + $0x8] sm:$0xff] %v1396
        %1405 = vst [vmem:[%s382 + $0x10] sm:$0xff] %v1397
        %1406 = vst [vmem:[%s382 + $0x18] sm:$0xff] %v1398
        %1407 = vst [vmem:[%s382 + $0x20] sm:$0xff] %v1399
        %1408 = vst [vmem:[%s382 + $0x28] sm:$0xff] %v1400
        %1409 = vst [vmem:[%s382 + $0x30] sm:$0xff] %v1401
        %1410 = vst [vmem:[%s382 + $0x38] sm:$0xff] %v1402
        %s1411 = sand.u32 %s226, 1
        %s1412 = scalar_lea.sflag [#allocation4], %s1411
        %s1413 = sand.u32 %s226, 1
        %s1414 = smul.addr %s1413, 64
        %s1415 = scalar_lea.vmem [#allocation3], %s1414
        // Predicated region
        $region49: #{tpu_custom_call.1} parent=47 // pred_check
          %p1416 = pneg %p236
        $region50: #{tpu_custom_call.1} parent=47 // pred_check_branch
          %1418 = sbr.rel (%p1416) target = $region52
        $region51: #{tpu_custom_call.1} parent=47 // pred_region
          %s1419 = smul.u32 2, %s28
          %s1421 = ssub.s32 1024, 1024
          %1422 = vsyncadd %s1412, %s1421
          %s1423 = smul.addr %s27, 8
          %s1424 = sadd.s32 %s1419, %s1423
          %s1425 = smul.addr %s1424, 128
          %s1426 = scalar_lea.hbm %s7, %s1425
          %s1427 = sshll.u32 %s1415, 4
          %s1428 = int_to_ptr.vmem [resolvable:$true] %s1427
          %1433 = dma.vmem_to_hbm [thread:$0]  %s1428, 1024, %s1426, %s1412, 256, 256, 16
        $region52: #{tpu_custom_call.1} parent=47 // pred_fallthru
          _
      $region48: #{tpu_custom_call.1} parent=5 // pred_fallthru
        _
      %p1434 = scmp.le.s32.totalorder 2, %s17
      // Predicated region
      $region53: #{tpu_custom_call.1} parent=5 // pred_check
        %p1435 = pneg %p1434
      $region54: #{tpu_custom_call.1} parent=5 // pred_check_branch
        %1437 = sbr.rel (%p1435) target = $region56
      $region55: #{tpu_custom_call.1} parent=5 // pred_region
        %s1438 = ssub.s32 %s17, 2
        // Predicated region
        $region57: #{tpu_custom_call.1} parent=55 // pred_check
          %p1439 = pneg %p242
        $region58: #{tpu_custom_call.1} parent=55 // pred_check_branch
          %1441 = sbr.rel (%p1439) target = $region60
        $region59: #{tpu_custom_call.1} parent=55 // pred_region
          %s1442 = sand.u32 %s227, 1
          %s1443 = scalar_lea.sflag [#allocation4], %s1442
          %s1444 = sand.u32 %s227, 1
          %s1445 = smul.addr %s1444, 64
          %s1446 = scalar_lea.vmem [#allocation3], %s1445
          %1447 = dma.done %s1443, 1024
        $region60: #{tpu_custom_call.1} parent=55 // pred_fallthru
          _
      $region56: #{tpu_custom_call.1} parent=5 // pred_fallthru
        _
    $region6: #{tpu_custom_call.1} parent=1 // loop_footer
      %s21 = sadd.s32 1, %s17
    $region7: #{tpu_custom_call.1} parent=1 // loop_footer_branch
      %16 = sbr.rel target = $region3
    $region8: #{tpu_custom_call.1} parent=1 // loop_exit
      _
    %1448 = vsyncpa [#allocation4], 1
    %s1449 = scalar_lea.sflag [#allocation4], 1
    %1450 = vsyncpa %s1449, 1

</llo_original>
